<compile_context>
chip_gen: v7x
topology: tpu7x:2x2x1
jax: 0.10.0
libtpu: 0.0.40
codegen_flags: <defaults>
</compile_context>

<pallas_src>
import functools

import jax
import jax.numpy as jnp
from jax.experimental import pallas as pl
from jax.experimental.pallas import tpu as pltpu

_WIN_RADIUS = 7            # Farneback winsize=15 -> 15x15 window -> radius 7
_HALO = _WIN_RADIUS + 1    # +1 row for the central-difference gradient
_LANE = 128                # lane width: keep W padded to a multiple of 128
_GRAY_TILE = 64            # small row tile for the (bandwidth-bound) gray pass


def _round_up(x, m):
    return (x + m - 1) // m * m


def _cdiv(a, b):
    return -(-a // b)


def _vmem_capacity_bytes():
    """Per-core VMEM capacity; conservative 64 MiB fallback (v7x-sized)."""
    try:
        return int(pltpu.get_tpu_info().vmem_capacity_bytes)
    except Exception:
        return 64 * 1024 * 1024


def _flow_vmem_estimate(th, wp):
    """Generous per-step VMEM estimate (bytes) for the flow kernel."""
    r = th + 2 * _HALO
    f = 4
    est = 0
    est += 2 * 2 * r * wp * f          # double-buffered halo tiles, both frames
    est += 2 * 2 * th * wp * f         # double-buffered (2, TH, Wp) output block
    est += 2 * th * r * f              # double-buffered band-matrix block
    est += r * 5 * wp * f              # concatenated gradient products
    est += 2 * th * 5 * wp * f         # row-summed planes + column accumulation
    est += 3 * r * wp * f              # ix, iy, it
    return est


def _pick_row_tile(H, Wp, budget):
    """Largest feasible row tile, then rebalanced to minimize Hp padding."""
    hr = _round_up(H, 8)
    th_max = 8
    for c in (512, 384, 320, 256, 192, 160, 128, 96, 64, 48, 32, 24, 16, 8):
        th = min(c, hr)
        if _flow_vmem_estimate(th, Wp) <= budget:
            th_max = th
            break
    n_rows = _cdiv(hr, th_max)
    th = _round_up(_cdiv(hr, n_rows), 8)     # th <= th_max, minimal Hp waste
    return th, n_rows


# --------------------------------------------------------------------------
# Stage 1: RGB -> cv2-style grayscale
# --------------------------------------------------------------------------
def _gray_kernel(x_ref, g_ref):
    """(1, 3, T, Wp) RGB tile -> (1, T, Wp) cv2-style grayscale tile."""
    # (x * 255).astype(np.uint8): inputs in [0, 1] so this is clip + floor.
    r = jnp.floor(jnp.clip(x_ref[0, 0] * 255.0, 0.0, 255.0))
    g = jnp.floor(jnp.clip(x_ref[0, 1] * 255.0, 0.0, 255.0))
    b = jnp.floor(jnp.clip(x_ref[0, 2] * 255.0, 0.0, 255.0))
    # OpenCV fixed-point RGB2GRAY: (4899*R + 9617*G + 1868*B + 8192) >> 14.
    # All intermediates are exact in f32 (< 2^24).
    g_ref[0] = jnp.floor(
        (4899.0 * r + 9617.0 * g + 1868.0 * b + 8192.0) * (1.0 / 16384.0))


# --------------------------------------------------------------------------
# Stage 2: single-level 15x15 Lucas-Kanade flow
# --------------------------------------------------------------------------
def _flow_kernel(bh_ref, gc_hbm, gp_hbm, o_ref, gc_buf, gp_buf, sem,
                 *, W, TH, Wp, n_rows):
    R = TH + 2 * _HALO
    b = pl.program_id(0)
    i = pl.program_id(1)
    slot = i % 2

    def _start(tile, s):
        row0 = pl.multiple_of(jnp.asarray(tile, jnp.int32) * TH, 8)
        pltpu.make_async_copy(gc_hbm.at[b, pl.ds(row0, R), :],
                              gc_buf.at[s], sem.at[0, s]).start()
        pltpu.make_async_copy(gp_hbm.at[b, pl.ds(row0, R), :],
                              gp_buf.at[s], sem.at[1, s]).start()

    # Prime the double-buffer at the first row tile of each batch image
    # (the row axis is "arbitrary", so within a batch the steps are in order).
    @pl.when(i == 0)
    def _():
        _start(0, 0)

    # Wait for the current tile's halo DMA (same transfer shape as at start).
    pltpu.make_async_copy(gc_hbm.at[b, pl.ds(0, R), :],
                          gc_buf.at[slot], sem.at[0, slot]).wait()
    pltpu.make_async_copy(gp_hbm.at[b, pl.ds(0, R), :],
                          gp_buf.at[slot], sem.at[1, slot]).wait()

    # Prefetch the next row tile of this batch image while computing.
    @pl.when(i + 1 < n_rows)
    def _():
        _start(i + 1, 1 - slot)

    gc = gc_buf[slot]   # gray_t tile (with halo)
    gp = gp_buf[slot]   # gray_{t-1} tile (with halo)

    lane = jax.lax.broadcasted_iota(jnp.int32, (1, Wp), 1)

    # --- Central-difference gradients via XLU rolls (non-negative shifts). ---
    # Right neighbour: roll by Wp-1 == roll(-1); wrap only affects lane Wp-1,
    # which is a masked padding column.  Right image border replication comes
    # free from the edge-padded columns; left border needs the lane==0 fix.
    gp_right = pltpu.roll(gp, Wp - 1, axis=1)                       # gp[:, j+1]
    gp_left = jnp.where(lane == 0, gp, pltpu.roll(gp, 1, axis=1))   # gp[:, j-1]
    ix = 0.5 * (gp_right - gp_left)
    # Row direction: halo rows cover the tile edges; buffer rows 0 and R-1
    # (wrapped by the rolls) are never reached by the band matrix.
    iy = 0.5 * (pltpu.roll(gp, R - 1, axis=0) - pltpu.roll(gp, 1, axis=0))
    it = gc - gp

    # Columns >= W contribute zero to every window sum (every product below
    # contains a masked ix or iy factor), matching the zero-pad semantics.
    colmask = (lane < W).astype(jnp.float32)
    ix = ix * colmask
    iy = iy * colmask

    # --- Row pass: ONE banded matmul over all five product planes. -----------
    # bh folds both the 15-tap row window and the image-row validity mask, so
    # tile borders are seam-free and padded rows contribute zero.
    prods = jnp.concatenate(
        [ix * ix, ix * iy, iy * iy, ix * it, iy * it], axis=1)      # (R, 5*Wp)
    t = jnp.dot(bh_ref[0], prods, preferred_element_type=jnp.float32)  # (TH,5*Wp)

    # --- Column pass: 15-tap lane shift-add (no (Wp,Wp) matmul). -------------
    # Safe to roll across the concatenated planes: Wp >= W + 7, and columns
    # >= W of each plane are zero, so wrap/cross-plane taps inject only zeros
    # into valid output columns.
    W5 = 5 * Wp
    s5 = t
    for k in range(1, _WIN_RADIUS + 1):
        s5 = s5 + pltpu.roll(t, k, axis=1) + pltpu.roll(t, W5 - k, axis=1)

    sxx = s5[:, 0 * Wp:1 * Wp]
    sxy = s5[:, 1 * Wp:2 * Wp]
    syy = s5[:, 2 * Wp:3 * Wp]
    sxt = s5[:, 3 * Wp:4 * Wp]
    syt = s5[:, 4 * Wp:5 * Wp]

    # --- Per-pixel 2x2 solve: [sxx sxy; sxy syy] [u; v] = -[sxt; syt] --------
    det = sxx * syy - sxy * sxy
    ok = jnp.abs(det) > 1e-6
    inv_det = jnp.where(ok, pl.reciprocal(jnp.where(ok, det, 1.0), approx=True),
                        0.0)
    o_ref[0, 0] = (-syy * sxt + sxy * syt) * inv_det   # u (horizontal)
    o_ref[0, 1] = (sxy * sxt - sxx * syt) * inv_det    # v (vertical)


def _forward_impl(x_t, x_tm1):
    B, C, H, W = x_t.shape
    # Lane padding with at least WIN_RADIUS spare columns so the column-pass
    # rolls never wrap valid data into valid output columns.
    Wp = _round_up(W + _WIN_RADIUS, _LANE)

    cap = _vmem_capacity_bytes()
    budget = min(int(cap * 0.55), 80 * 1024 * 1024)
    TH, n_rows = _pick_row_tile(H, Wp, budget)
    Hp = n_rows * TH
    R = TH + 2 * _HALO
    vmem_limit = max(32 * 1024 * 1024, min(int(cap * 0.85), 112 * 1024 * 1024))

    # Gray planes carry their 8-row halo directly (edge replication baked into
    # the RGB pad), so no separate full-frame ext-pad pass is needed.
    Hg = _round_up(Hp + 2 * _HALO, _GRAY_TILE)
    n_gray = Hg // _GRAY_TILE

    def pad_rgb(x):
        return jnp.pad(x.astype(jnp.float32),
                       ((0, 0), (0, 0), (_HALO, Hg - _HALO - H), (0, Wp - W)),
                       mode="edge")

    x_t_p = pad_rgb(x_t)
    x_tm1_p = pad_rgb(x_tm1)

    # --- Stage 1: RGB -> grayscale (small row tile, auto-pipelined). ---------
    gray = pl.pallas_call(
        _gray_kernel,
        out_shape=jax.ShapeDtypeStruct((B, Hg, Wp), jnp.float32),
        grid_spec=pltpu.PrefetchScalarGridSpec(
            num_scalar_prefetch=0,
            grid=(B, n_gray),
            in_specs=[pl.BlockSpec((1, 3, _GRAY_TILE, Wp),
                                   lambda b, i: (b, 0, i, 0))],
            out_specs=pl.BlockSpec((1, _GRAY_TILE, Wp), lambda b, i: (b, i, 0)),
        ),
        compiler_params=pltpu.CompilerParams(
            dimension_semantics=("parallel", "parallel")),
    )
    g_cur = gray(x_t_p)
    g_prev = gray(x_tm1_p)

    # --- Precomputed banded row-pass matrices (one per row tile). ------------
    # bh[i, r, k] = 1 iff buffer row k is within +-7 rows of output row r of
    # tile i AND maps to a valid image row (zero contribution outside image).
    r_idx = jnp.arange(TH, dtype=jnp.int32)
    k_idx = jnp.arange(R, dtype=jnp.int32)
    i_idx = jnp.arange(n_rows, dtype=jnp.int32)
    band = jnp.abs(k_idx[None, :] - (r_idx[:, None] + _HALO)) <= _WIN_RADIUS
    g_row = i_idx[:, None, None] * TH + k_idx[None, None, :] - _HALO
    valid = (g_row >= 0) & (g_row < H)
    bh = (band[None] & valid).astype(jnp.float32)        # (n_rows, TH, R)

    # --- Stage 2: Lucas-Kanade flow. -----------------------------------------
    kernel = functools.partial(_flow_kernel, W=W, TH=TH, Wp=Wp, n_rows=n_rows)
    flow = pl.pallas_call(
        kernel,
        out_shape=jax.ShapeDtypeStruct((B, 2, Hp, Wp), jnp.float32),
        grid_spec=pltpu.PrefetchScalarGridSpec(
            num_scalar_prefetch=0,
            grid=(B, n_rows),
            in_specs=[pl.BlockSpec((1, TH, R), lambda b, i: (i, 0, 0)),
                      pl.BlockSpec(memory_space=pl.ANY),    # gray_t (HBM)
                      pl.BlockSpec(memory_space=pl.ANY)],   # gray_{t-1} (HBM)
            out_specs=pl.BlockSpec((1, 2, TH, Wp), lambda b, i: (b, 0, i, 0)),
            scratch_shapes=[pltpu.VMEM((2, R, Wp), jnp.float32),
                            pltpu.VMEM((2, R, Wp), jnp.float32),
                            pltpu.SemaphoreType.DMA((2, 2))],
        ),
        # Row axis is "arbitrary": the cross-step DMA prefetch carries state
        # along it; the batch axis stays "parallel" for megacore sharding.
        compiler_params=pltpu.CompilerParams(
            dimension_semantics=("parallel", "arbitrary"),
            vmem_limit_bytes=vmem_limit),
    )(bh, g_cur, g_prev)

    return flow[:, :, :H, :W]


_forward_jit = jax.jit(_forward_impl)


def optical_flow_computation(x_t, x_t_minus_1=None):
    """Forward pass of OpticalFlowComputation.

    x_t, x_t_minus_1: (B, 3, H, W) float32 in [0, 1].  Returns (B, 2, H, W).
    """
    B, C, H, W = x_t.shape
    assert C == 3, "expects RGB input (B, 3, H, W)"
    if x_t_minus_1 is None:
        # Matches the torch.zeros(batch, 2, H, W) branch.
        return jnp.zeros((B, 2, H, W), jnp.float32)
    return _forward_jit(x_t, x_t_minus_1)


if __name__ == "__main__":
    key = jax.random.PRNGKey(0)
    k1, k2 = jax.random.split(key)
    B, C, H, W = 2, 3, 16, 16
    x_t = jax.random.uniform(k1, (B, C, H, W), dtype=jnp.float32)
    x_t_minus_1 = jax.random.uniform(k2, (B, C, H, W), dtype=jnp.float32)

    # None branch (zero flow), as in the PyTorch module.
    zero_flow = jax.block_until_ready(optical_flow_computation(x_t, None))
    assert zero_flow.shape == (B, 2, H, W)
    assert float(jnp.abs(zero_flow).max()) == 0.0

    # Main branch: Pallas kernels.
    flow = jax.block_until_ready(optical_flow_computation(x_t, x_t_minus_1))
    assert flow.shape == (B, 2, H, W)
    assert flow.dtype == jnp.float32
    assert bool(jnp.isfinite(flow).all())

    print("KERNEL_OK")
</pallas_src>

<mosaic_0001>
module attributes {stable_mosaic.version = 11 : i64} {
  func.func @_gray_kernel(%arg0: i32, %arg1: i32, %arg2: memref<1x3x64x128xf32, #tpu.memory_space<vmem>>, %arg3: memref<1x64x128xf32, #tpu.memory_space<vmem>>) attributes {dimension_semantics = [#tpu.dimension_semantics<parallel>, #tpu.dimension_semantics<parallel>], iteration_bounds = array<i64: 2, 1>, scalar_prefetch = 0 : i64, scratch_operands = 0 : i64, tpu.core_type = #tpu.core_type<tc>, window_params = [{transform_indices = @transform_0, window_bounds = array<i64: 1, 3, 64, 128>}, {transform_indices = @transform_1, window_bounds = array<i64: 1, 64, 128>}]} {
    %c0 = arith.constant 0 : index
    %c0_0 = arith.constant 0 : index
    %c0_1 = arith.constant 0 : index
    %c0_2 = arith.constant 0 : index
    %0 = vector.load %arg2[%c0, %c0_0, %c0_1, %c0_2] : memref<1x3x64x128xf32, #tpu.memory_space<vmem>>, vector<1x1x64x128xf32>
    %1 = vector.shape_cast %0 : vector<1x1x64x128xf32> to vector<64x128xf32>
    %cst = arith.constant 2.550000e+02 : f32
    %2 = vector.broadcast %cst : f32 to vector<64x128xf32>
    %3 = arith.mulf %1, %2 : vector<64x128xf32>
    %cst_3 = arith.constant 0.000000e+00 : f32
    %cst_4 = arith.constant 2.550000e+02 : f32
    %4 = vector.broadcast %cst_3 : f32 to vector<64x128xf32>
    %5 = arith.maximumf %4, %3 : vector<64x128xf32>
    %6 = vector.broadcast %cst_4 : f32 to vector<64x128xf32>
    %7 = arith.minimumf %6, %5 : vector<64x128xf32>
    %8 = math.floor %7 : vector<64x128xf32>
    %c0_5 = arith.constant 0 : index
    %c1 = arith.constant 1 : index
    %c0_6 = arith.constant 0 : index
    %c0_7 = arith.constant 0 : index
    %9 = vector.load %arg2[%c0_5, %c1, %c0_6, %c0_7] : memref<1x3x64x128xf32, #tpu.memory_space<vmem>>, vector<1x1x64x128xf32>
    %10 = vector.shape_cast %9 : vector<1x1x64x128xf32> to vector<64x128xf32>
    %cst_8 = arith.constant 2.550000e+02 : f32
    %11 = vector.broadcast %cst_8 : f32 to vector<64x128xf32>
    %12 = arith.mulf %10, %11 : vector<64x128xf32>
    %cst_9 = arith.constant 0.000000e+00 : f32
    %cst_10 = arith.constant 2.550000e+02 : f32
    %13 = vector.broadcast %cst_9 : f32 to vector<64x128xf32>
    %14 = arith.maximumf %13, %12 : vector<64x128xf32>
    %15 = vector.broadcast %cst_10 : f32 to vector<64x128xf32>
    %16 = arith.minimumf %15, %14 : vector<64x128xf32>
    %17 = math.floor %16 : vector<64x128xf32>
    %c0_11 = arith.constant 0 : index
    %c2 = arith.constant 2 : index
    %c0_12 = arith.constant 0 : index
    %c0_13 = arith.constant 0 : index
    %18 = vector.load %arg2[%c0_11, %c2, %c0_12, %c0_13] : memref<1x3x64x128xf32, #tpu.memory_space<vmem>>, vector<1x1x64x128xf32>
    %19 = vector.shape_cast %18 : vector<1x1x64x128xf32> to vector<64x128xf32>
    %cst_14 = arith.constant 2.550000e+02 : f32
    %20 = vector.broadcast %cst_14 : f32 to vector<64x128xf32>
    %21 = arith.mulf %19, %20 : vector<64x128xf32>
    %cst_15 = arith.constant 0.000000e+00 : f32
    %cst_16 = arith.constant 2.550000e+02 : f32
    %22 = vector.broadcast %cst_15 : f32 to vector<64x128xf32>
    %23 = arith.maximumf %22, %21 : vector<64x128xf32>
    %24 = vector.broadcast %cst_16 : f32 to vector<64x128xf32>
    %25 = arith.minimumf %24, %23 : vector<64x128xf32>
    %26 = math.floor %25 : vector<64x128xf32>
    %cst_17 = arith.constant 4.899000e+03 : f32
    %27 = vector.broadcast %cst_17 : f32 to vector<64x128xf32>
    %28 = arith.mulf %27, %8 : vector<64x128xf32>
    %cst_18 = arith.constant 9.617000e+03 : f32
    %29 = vector.broadcast %cst_18 : f32 to vector<64x128xf32>
    %30 = arith.mulf %29, %17 : vector<64x128xf32>
    %31 = arith.addf %28, %30 : vector<64x128xf32>
    %cst_19 = arith.constant 1.868000e+03 : f32
    %32 = vector.broadcast %cst_19 : f32 to vector<64x128xf32>
    %33 = arith.mulf %32, %26 : vector<64x128xf32>
    %34 = arith.addf %31, %33 : vector<64x128xf32>
    %cst_20 = arith.constant 8.192000e+03 : f32
    %35 = vector.broadcast %cst_20 : f32 to vector<64x128xf32>
    %36 = arith.addf %34, %35 : vector<64x128xf32>
    %cst_21 = arith.constant 6.10351563E-5 : f32
    %37 = vector.broadcast %cst_21 : f32 to vector<64x128xf32>
    %38 = arith.mulf %36, %37 : vector<64x128xf32>
    %39 = math.floor %38 : vector<64x128xf32>
    %c0_22 = arith.constant 0 : index
    %c0_23 = arith.constant 0 : index
    %c0_24 = arith.constant 0 : index
    %40 = vector.load %arg3[%c0_22, %c0_23, %c0_24] : memref<1x64x128xf32, #tpu.memory_space<vmem>>, vector<1x64x128xf32>
    %41 = vector.shape_cast %40 : vector<1x64x128xf32> to vector<64x128xf32>
    %42 = vector.shape_cast %39 : vector<64x128xf32> to vector<1x64x128xf32>
    tpu.vector_store %arg3[%c0_22, %c0_23, %c0_24], %42 {strides = array<i32>} : memref<1x64x128xf32, #tpu.memory_space<vmem>>, vector<1x64x128xf32>,
    return
  }
  func.func @transform_0(%arg0: i32, %arg1: i32) -> (i32, i32, i32, i32) {
    %c0_i32 = arith.constant 0 : i32
    %c0_i32_0 = arith.constant 0 : i32
    %c0_i32_1 = arith.constant 0 : i32
    return %arg0, %c0_i32, %arg1, %c0_i32_0 : i32, i32, i32, i32
  }
  func.func @transform_1(%arg0: i32, %arg1: i32) -> (i32, i32, i32) {
    %c0_i32 = arith.constant 0 : i32
    %c0_i32_0 = arith.constant 0 : i32
    return %arg0, %arg1, %c0_i32 : i32, i32, i32
  }
}

module attributes {stable_mosaic.version = 11 : i64} {
  func.func @_flow_kernel(%arg0: i32, %arg1: i32, %arg2: memref<1x16x32xf32, #tpu.memory_space<vmem>>, %arg3: memref<2x64x128xf32, #tpu.memory_space<any>>, %arg4: memref<2x64x128xf32, #tpu.memory_space<any>>, %arg5: memref<1x2x16x128xf32, #tpu.memory_space<vmem>>, %arg6: memref<2x32x128xf32, #tpu.memory_space<vmem>>, %arg7: memref<2x32x128xf32, #tpu.memory_space<vmem>>, %arg8: memref<2x2x!tpu.dma_semaphore, #tpu.memory_space<semaphore_mem>>) attributes {dimension_semantics = [#tpu.dimension_semantics<parallel>, #tpu.dimension_semantics<arbitrary>], iteration_bounds = array<i64: 2, 1>, scalar_prefetch = 0 : i64, scratch_operands = 3 : i64, tpu.core_type = #tpu.core_type<tc>, window_params = [{transform_indices = @transform_0, window_bounds = array<i64: 1, 16, 32>}, {}, {}, {transform_indices = @transform_3, window_bounds = array<i64: 1, 2, 16, 128>}]} {
    %c2_i32 = arith.constant 2 : i32
    %c0_i32 = arith.constant 0 : i32
    %0 = arith.cmpi eq, %c2_i32, %c0_i32 : i32
    %c1_i32 = arith.constant 1 : i32
    %1 = arith.select %0, %c1_i32, %c2_i32 : i32
    %2 = arith.remsi %arg1, %1 : i32
    %c0_i32_0 = arith.constant 0 : i32
    %3 = arith.cmpi ne, %2, %c0_i32_0 : i32
    %c0_i32_1 = arith.constant 0 : i32
    %4 = arith.cmpi slt, %2, %c0_i32_1 : i32
    %c0_i32_2 = arith.constant 0 : i32
    %5 = arith.cmpi slt, %1, %c0_i32_2 : i32
    %6 = arith.xori %4, %5 : i1
    %7 = arith.andi %6, %3 : i1
    %8 = arith.addi %2, %1 : i32
    %9 = arith.select %7, %8, %2 : i32
    %c0_i32_3 = arith.constant 0 : i32
    %10 = arith.cmpi eq, %arg1, %c0_i32_3 : i32
    %11 = arith.extui %10 : i1 to i32
    %c0_i32_4 = arith.constant 0 : i32
    %12 = arith.cmpi ne, %11, %c0_i32_4 : i32
    scf.if %12 {
      %c0_i32_42 = arith.constant 0 : i32
      %c16_i32_43 = arith.constant 16 : i32
      %129 = arith.muli %c0_i32_42, %c16_i32_43 : i32
      %130 = tpu.assume_multiple %129, 8 : i32
      %c0_i32_44 = arith.constant 0 : i32
      %c0_i32_45 = arith.constant 0 : i32
      %c0_i32_46 = arith.constant 0 : i32
      %c0_i32_47 = arith.constant 0 : i32
      %131 = tpu.memref_slice %arg3[%arg0, %130, %c0_i32_47] : memref<2x64x128xf32, #tpu.memory_space<any>> -> memref<1x32x128xf32, #tpu.memory_space<any>>
      %132 = tpu.memref_squeeze %131 : memref<1x32x128xf32, #tpu.memory_space<any>> -> memref<32x128xf32, #tpu.memory_space<any>>
      %c0_i32_48 = arith.constant 0 : i32
      %c0_i32_49 = arith.constant 0 : i32
      %133 = tpu.memref_slice %arg6[%c0_i32_44, %c0_i32_48, %c0_i32_49] : memref<2x32x128xf32, #tpu.memory_space<vmem>> -> memref<1x32x128xf32, #tpu.memory_space<vmem>>
      %134 = tpu.memref_squeeze %133 : memref<1x32x128xf32, #tpu.memory_space<vmem>> -> memref<32x128xf32, #tpu.memory_space<vmem>>
      %135 = tpu.memref_slice %arg8[%c0_i32_45, %c0_i32_46] : memref<2x2x!tpu.dma_semaphore, #tpu.memory_space<semaphore_mem>> -> memref<1x1x!tpu.dma_semaphore, #tpu.memory_space<semaphore_mem>>
      %136 = tpu.memref_squeeze %135 : memref<1x1x!tpu.dma_semaphore, #tpu.memory_space<semaphore_mem>> -> memref<!tpu.dma_semaphore, #tpu.memory_space<semaphore_mem>>
      tpu.enqueue_dma source(%132 : memref<32x128xf32, #tpu.memory_space<any>>) target(%134 : memref<32x128xf32, #tpu.memory_space<vmem>>) target_semaphore(%136 : memref<!tpu.dma_semaphore, #tpu.memory_space<semaphore_mem>>)
      %c0_i32_50 = arith.constant 0 : i32
      %c1_i32_51 = arith.constant 1 : i32
      %c0_i32_52 = arith.constant 0 : i32
      %c0_i32_53 = arith.constant 0 : i32
      %137 = tpu.memref_slice %arg4[%arg0, %130, %c0_i32_53] : memref<2x64x128xf32, #tpu.memory_space<any>> -> memref<1x32x128xf32, #tpu.memory_space<any>>
      %138 = tpu.memref_squeeze %137 : memref<1x32x128xf32, #tpu.memory_space<any>> -> memref<32x128xf32, #tpu.memory_space<any>>
      %c0_i32_54 = arith.constant 0 : i32
      %c0_i32_55 = arith.constant 0 : i32
      %139 = tpu.memref_slice %arg7[%c0_i32_50, %c0_i32_54, %c0_i32_55] : memref<2x32x128xf32, #tpu.memory_space<vmem>> -> memref<1x32x128xf32, #tpu.memory_space<vmem>>
      %140 = tpu.memref_squeeze %139 : memref<1x32x128xf32, #tpu.memory_space<vmem>> -> memref<32x128xf32, #tpu.memory_space<vmem>>
      %141 = tpu.memref_slice %arg8[%c1_i32_51, %c0_i32_52] : memref<2x2x!tpu.dma_semaphore, #tpu.memory_space<semaphore_mem>> -> memref<1x1x!tpu.dma_semaphore, #tpu.memory_space<semaphore_mem>>
      %142 = tpu.memref_squeeze %141 : memref<1x1x!tpu.dma_semaphore, #tpu.memory_space<semaphore_mem>> -> memref<!tpu.dma_semaphore, #tpu.memory_space<semaphore_mem>>
      tpu.enqueue_dma source(%138 : memref<32x128xf32, #tpu.memory_space<any>>) target(%140 : memref<32x128xf32, #tpu.memory_space<vmem>>) target_semaphore(%142 : memref<!tpu.dma_semaphore, #tpu.memory_space<semaphore_mem>>)
    } else {
    }
    %c0_i32_5 = arith.constant 0 : i32
    %c0_i32_6 = arith.constant 0 : i32
    %c0_i32_7 = arith.constant 0 : i32
    %13 = tpu.memref_slice %arg3[%arg0, %c0_i32_6, %c0_i32_7] : memref<2x64x128xf32, #tpu.memory_space<any>> -> memref<1x32x128xf32, #tpu.memory_space<any>>
    %14 = tpu.memref_squeeze %13 : memref<1x32x128xf32, #tpu.memory_space<any>> -> memref<32x128xf32, #tpu.memory_space<any>>
    %c0_i32_8 = arith.constant 0 : i32
    %c0_i32_9 = arith.constant 0 : i32
    %15 = tpu.memref_slice %arg6[%9, %c0_i32_8, %c0_i32_9] : memref<2x32x128xf32, #tpu.memory_space<vmem>> -> memref<1x32x128xf32, #tpu.memory_space<vmem>>
    %16 = tpu.memref_squeeze %15 : memref<1x32x128xf32, #tpu.memory_space<vmem>> -> memref<32x128xf32, #tpu.memory_space<vmem>>
    %17 = tpu.memref_slice %arg8[%c0_i32_5, %9] : memref<2x2x!tpu.dma_semaphore, #tpu.memory_space<semaphore_mem>> -> memref<1x1x!tpu.dma_semaphore, #tpu.memory_space<semaphore_mem>>
    %18 = tpu.memref_squeeze %17 : memref<1x1x!tpu.dma_semaphore, #tpu.memory_space<semaphore_mem>> -> memref<!tpu.dma_semaphore, #tpu.memory_space<semaphore_mem>>
    tpu.wait_dma2 semaphore(%18 : memref<!tpu.dma_semaphore, #tpu.memory_space<semaphore_mem>>) src(%14 : memref<32x128xf32, #tpu.memory_space<any>>) dst(%16 : memref<32x128xf32, #tpu.memory_space<vmem>>)
    %c1_i32_10 = arith.constant 1 : i32
    %c0_i32_11 = arith.constant 0 : i32
    %c0_i32_12 = arith.constant 0 : i32
    %19 = tpu.memref_slice %arg4[%arg0, %c0_i32_11, %c0_i32_12] : memref<2x64x128xf32, #tpu.memory_space<any>> -> memref<1x32x128xf32, #tpu.memory_space<any>>
    %20 = tpu.memref_squeeze %19 : memref<1x32x128xf32, #tpu.memory_space<any>> -> memref<32x128xf32, #tpu.memory_space<any>>
    %c0_i32_13 = arith.constant 0 : i32
    %c0_i32_14 = arith.constant 0 : i32
    %21 = tpu.memref_slice %arg7[%9, %c0_i32_13, %c0_i32_14] : memref<2x32x128xf32, #tpu.memory_space<vmem>> -> memref<1x32x128xf32, #tpu.memory_space<vmem>>
    %22 = tpu.memref_squeeze %21 : memref<1x32x128xf32, #tpu.memory_space<vmem>> -> memref<32x128xf32, #tpu.memory_space<vmem>>
    %23 = tpu.memref_slice %arg8[%c1_i32_10, %9] : memref<2x2x!tpu.dma_semaphore, #tpu.memory_space<semaphore_mem>> -> memref<1x1x!tpu.dma_semaphore, #tpu.memory_space<semaphore_mem>>
    %24 = tpu.memref_squeeze %23 : memref<1x1x!tpu.dma_semaphore, #tpu.memory_space<semaphore_mem>> -> memref<!tpu.dma_semaphore, #tpu.memory_space<semaphore_mem>>
    tpu.wait_dma2 semaphore(%24 : memref<!tpu.dma_semaphore, #tpu.memory_space<semaphore_mem>>) src(%20 : memref<32x128xf32, #tpu.memory_space<any>>) dst(%22 : memref<32x128xf32, #tpu.memory_space<vmem>>)
    %c1_i32_15 = arith.constant 1 : i32
    %25 = arith.addi %arg1, %c1_i32_15 : i32
    %c1_i32_16 = arith.constant 1 : i32
    %26 = arith.cmpi slt, %25, %c1_i32_16 : i32
    %27 = arith.extui %26 : i1 to i32
    %c0_i32_17 = arith.constant 0 : i32
    %28 = arith.cmpi ne, %27, %c0_i32_17 : i32
    scf.if %28 {
      %c1_i32_42 = arith.constant 1 : i32
      %129 = arith.addi %arg1, %c1_i32_42 : i32
      %c1_i32_43 = arith.constant 1 : i32
      %130 = arith.subi %c1_i32_43, %9 : i32
      %c16_i32_44 = arith.constant 16 : i32
      %131 = arith.muli %129, %c16_i32_44 : i32
      %132 = tpu.assume_multiple %131, 8 : i32
      %c0_i32_45 = arith.constant 0 : i32
      %c0_i32_46 = arith.constant 0 : i32
      %133 = tpu.memref_slice %arg3[%arg0, %132, %c0_i32_46] : memref<2x64x128xf32, #tpu.memory_space<any>> -> memref<1x32x128xf32, #tpu.memory_space<any>>
      %134 = tpu.memref_squeeze %133 : memref<1x32x128xf32, #tpu.memory_space<any>> -> memref<32x128xf32, #tpu.memory_space<any>>
      %c0_i32_47 = arith.constant 0 : i32
      %c0_i32_48 = arith.constant 0 : i32
      %135 = tpu.memref_slice %arg6[%130, %c0_i32_47, %c0_i32_48] : memref<2x32x128xf32, #tpu.memory_space<vmem>> -> memref<1x32x128xf32, #tpu.memory_space<vmem>>
      %136 = tpu.memref_squeeze %135 : memref<1x32x128xf32, #tpu.memory_space<vmem>> -> memref<32x128xf32, #tpu.memory_space<vmem>>
      %137 = tpu.memref_slice %arg8[%c0_i32_45, %130] : memref<2x2x!tpu.dma_semaphore, #tpu.memory_space<semaphore_mem>> -> memref<1x1x!tpu.dma_semaphore, #tpu.memory_space<semaphore_mem>>
      %138 = tpu.memref_squeeze %137 : memref<1x1x!tpu.dma_semaphore, #tpu.memory_space<semaphore_mem>> -> memref<!tpu.dma_semaphore, #tpu.memory_space<semaphore_mem>>
      tpu.enqueue_dma source(%134 : memref<32x128xf32, #tpu.memory_space<any>>) target(%136 : memref<32x128xf32, #tpu.memory_space<vmem>>) target_semaphore(%138 : memref<!tpu.dma_semaphore, #tpu.memory_space<semaphore_mem>>)
      %c1_i32_49 = arith.constant 1 : i32
      %c0_i32_50 = arith.constant 0 : i32
      %139 = tpu.memref_slice %arg4[%arg0, %132, %c0_i32_50] : memref<2x64x128xf32, #tpu.memory_space<any>> -> memref<1x32x128xf32, #tpu.memory_space<any>>
      %140 = tpu.memref_squeeze %139 : memref<1x32x128xf32, #tpu.memory_space<any>> -> memref<32x128xf32, #tpu.memory_space<any>>
      %c0_i32_51 = arith.constant 0 : i32
      %c0_i32_52 = arith.constant 0 : i32
      %141 = tpu.memref_slice %arg7[%130, %c0_i32_51, %c0_i32_52] : memref<2x32x128xf32, #tpu.memory_space<vmem>> -> memref<1x32x128xf32, #tpu.memory_space<vmem>>
      %142 = tpu.memref_squeeze %141 : memref<1x32x128xf32, #tpu.memory_space<vmem>> -> memref<32x128xf32, #tpu.memory_space<vmem>>
      %143 = tpu.memref_slice %arg8[%c1_i32_49, %130] : memref<2x2x!tpu.dma_semaphore, #tpu.memory_space<semaphore_mem>> -> memref<1x1x!tpu.dma_semaphore, #tpu.memory_space<semaphore_mem>>
      %144 = tpu.memref_squeeze %143 : memref<1x1x!tpu.dma_semaphore, #tpu.memory_space<semaphore_mem>> -> memref<!tpu.dma_semaphore, #tpu.memory_space<semaphore_mem>>
      tpu.enqueue_dma source(%140 : memref<32x128xf32, #tpu.memory_space<any>>) target(%142 : memref<32x128xf32, #tpu.memory_space<vmem>>) target_semaphore(%144 : memref<!tpu.dma_semaphore, #tpu.memory_space<semaphore_mem>>)
    } else {
    }
    %29 = arith.index_cast %9 : i32 to index
    %c0 = arith.constant 0 : index
    %c0_18 = arith.constant 0 : index
    %30 = vector.load %arg6[%29, %c0, %c0_18] : memref<2x32x128xf32, #tpu.memory_space<vmem>>, vector<1x32x128xf32>
    %31 = vector.shape_cast %30 : vector<1x32x128xf32> to vector<32x128xf32>
    %32 = arith.index_cast %9 : i32 to index
    %c0_19 = arith.constant 0 : index
    %c0_20 = arith.constant 0 : index
    %33 = vector.load %arg7[%32, %c0_19, %c0_20] : memref<2x32x128xf32, #tpu.memory_space<vmem>>, vector<1x32x128xf32>
    %34 = vector.shape_cast %33 : vector<1x32x128xf32> to vector<32x128xf32>
    %35 = tpu.iota {dimensions = array<i32: 1>} : vector<1x128xi32>
    %c127_i32 = arith.constant 127 : i32
    %36 = tpu.dynamic_rotate %34 by %c127_i32 dim 1 : vector<32x128xf32>, i32 -> vector<32x128xf32>
    %c0_i32_21 = arith.constant 0 : i32
    %37 = vector.broadcast %c0_i32_21 : i32 to vector<1x128xi32>
    %38 = arith.cmpi eq, %35, %37 : vector<1x128xi32>
    %c1_i32_22 = arith.constant 1 : i32
    %39 = tpu.dynamic_rotate %34 by %c1_i32_22 dim 1 : vector<32x128xf32>, i32 -> vector<32x128xf32>
    %40 = vector.shape_cast %38 : vector<1x128xi1> to vector<1x128xi1>
    %41 = vector.broadcast %40 : vector<1x128xi1> to vector<32x128xi1>
    %42 = arith.select %41, %34, %39 : vector<32x128xi1>, vector<32x128xf32>
    %43 = arith.subf %36, %42 : vector<32x128xf32>
    %cst = arith.constant 5.000000e-01 : f32
    %44 = vector.broadcast %cst : f32 to vector<32x128xf32>
    %45 = arith.mulf %44, %43 : vector<32x128xf32>
    %c31_i32 = arith.constant 31 : i32
    %46 = tpu.dynamic_rotate %34 by %c31_i32 dim 0 : vector<32x128xf32>, i32 -> vector<32x128xf32>
    %c1_i32_23 = arith.constant 1 : i32
    %47 = tpu.dynamic_rotate %34 by %c1_i32_23 dim 0 : vector<32x128xf32>, i32 -> vector<32x128xf32>
    %48 = arith.subf %46, %47 : vector<32x128xf32>
    %cst_24 = arith.constant 5.000000e-01 : f32
    %49 = vector.broadcast %cst_24 : f32 to vector<32x128xf32>
    %50 = arith.mulf %49, %48 : vector<32x128xf32>
    %51 = arith.subf %31, %34 : vector<32x128xf32>
    %c16_i32 = arith.constant 16 : i32
    %52 = vector.broadcast %c16_i32 : i32 to vector<1x128xi32>
    %53 = arith.cmpi slt, %35, %52 : vector<1x128xi32>
    %54 = arith.extui %53 : vector<1x128xi1> to vector<1x128xi32>
    %55 = arith.sitofp %54 : vector<1x128xi32> to vector<1x128xf32>
    %56 = vector.broadcast %55 : vector<1x128xf32> to vector<32x128xf32>
    %57 = arith.mulf %45, %56 : vector<32x128xf32>
    %58 = vector.broadcast %55 : vector<1x128xf32> to vector<32x128xf32>
    %59 = arith.mulf %50, %58 : vector<32x128xf32>
    %60 = arith.mulf %57, %57 : vector<32x128xf32>
    %61 = arith.mulf %57, %59 : vector<32x128xf32>
    %62 = arith.mulf %59, %59 : vector<32x128xf32>
    %63 = arith.mulf %57, %51 : vector<32x128xf32>
    %64 = arith.mulf %59, %51 : vector<32x128xf32>
    %65 = tpu.concatenate %60, %61, %62, %63, %64 in 1 : vector<32x128xf32>, vector<32x128xf32>, vector<32x128xf32>, vector<32x128xf32>, vector<32x128xf32> -> vector<32x640xf32>
    %c0_25 = arith.constant 0 : index
    %c0_26 = arith.constant 0 : index
    %c0_27 = arith.constant 0 : index
    %66 = vector.load %arg2[%c0_25, %c0_26, %c0_27] : memref<1x16x32xf32, #tpu.memory_space<vmem>>, vector<1x16x32xf32>
    %67 = vector.shape_cast %66 : vector<1x16x32xf32> to vector<16x32xf32>
    %cst_28 = arith.constant dense<0.000000e+00> : vector<16x640xf32>
    %68 = tpu.matmul %67, %65, %cst_28 {dimension_numbers = #tpu.dot_dimension_numbers<[1], [0], [0], [1], [0, 0, 1, 1], [], []>} : vector<16x32xf32>, vector<32x640xf32>, vector<16x640xf32> -> vector<16x640xf32>
    %c1_i32_29 = arith.constant 1 : i32
    %69 = tpu.dynamic_rotate %68 by %c1_i32_29 dim 1 : vector<16x640xf32>, i32 -> vector<16x640xf32>
    %70 = arith.addf %68, %69 : vector<16x640xf32>
    %c639_i32 = arith.constant 639 : i32
    %71 = tpu.dynamic_rotate %68 by %c639_i32 dim 1 : vector<16x640xf32>, i32 -> vector<16x640xf32>
    %72 = arith.addf %70, %71 : vector<16x640xf32>
    %c2_i32_30 = arith.constant 2 : i32
    %73 = tpu.dynamic_rotate %68 by %c2_i32_30 dim 1 : vector<16x640xf32>, i32 -> vector<16x640xf32>
    %74 = arith.addf %72, %73 : vector<16x640xf32>
    %c638_i32 = arith.constant 638 : i32
    %75 = tpu.dynamic_rotate %68 by %c638_i32 dim 1 : vector<16x640xf32>, i32 -> vector<16x640xf32>
    %76 = arith.addf %74, %75 : vector<16x640xf32>
    %c3_i32 = arith.constant 3 : i32
    %77 = tpu.dynamic_rotate %68 by %c3_i32 dim 1 : vector<16x640xf32>, i32 -> vector<16x640xf32>
    %78 = arith.addf %76, %77 : vector<16x640xf32>
    %c637_i32 = arith.constant 637 : i32
    %79 = tpu.dynamic_rotate %68 by %c637_i32 dim 1 : vector<16x640xf32>, i32 -> vector<16x640xf32>
    %80 = arith.addf %78, %79 : vector<16x640xf32>
    %c4_i32 = arith.constant 4 : i32
    %81 = tpu.dynamic_rotate %68 by %c4_i32 dim 1 : vector<16x640xf32>, i32 -> vector<16x640xf32>
    %82 = arith.addf %80, %81 : vector<16x640xf32>
    %c636_i32 = arith.constant 636 : i32
    %83 = tpu.dynamic_rotate %68 by %c636_i32 dim 1 : vector<16x640xf32>, i32 -> vector<16x640xf32>
    %84 = arith.addf %82, %83 : vector<16x640xf32>
    %c5_i32 = arith.constant 5 : i32
    %85 = tpu.dynamic_rotate %68 by %c5_i32 dim 1 : vector<16x640xf32>, i32 -> vector<16x640xf32>
    %86 = arith.addf %84, %85 : vector<16x640xf32>
    %c635_i32 = arith.constant 635 : i32
    %87 = tpu.dynamic_rotate %68 by %c635_i32 dim 1 : vector<16x640xf32>, i32 -> vector<16x640xf32>
    %88 = arith.addf %86, %87 : vector<16x640xf32>
    %c6_i32 = arith.constant 6 : i32
    %89 = tpu.dynamic_rotate %68 by %c6_i32 dim 1 : vector<16x640xf32>, i32 -> vector<16x640xf32>
    %90 = arith.addf %88, %89 : vector<16x640xf32>
    %c634_i32 = arith.constant 634 : i32
    %91 = tpu.dynamic_rotate %68 by %c634_i32 dim 1 : vector<16x640xf32>, i32 -> vector<16x640xf32>
    %92 = arith.addf %90, %91 : vector<16x640xf32>
    %c7_i32 = arith.constant 7 : i32
    %93 = tpu.dynamic_rotate %68 by %c7_i32 dim 1 : vector<16x640xf32>, i32 -> vector<16x640xf32>
    %94 = arith.addf %92, %93 : vector<16x640xf32>
    %c633_i32 = arith.constant 633 : i32
    %95 = tpu.dynamic_rotate %68 by %c633_i32 dim 1 : vector<16x640xf32>, i32 -> vector<16x640xf32>
    %96 = arith.addf %94, %95 : vector<16x640xf32>
    %97 = vector.extract_strided_slice %96 {offsets = [0, 0], sizes = [16, 128], strides = [1, 1]} : vector<16x640xf32> to vector<16x128xf32>
    %98 = vector.extract_strided_slice %96 {offsets = [0, 128], sizes = [16, 128], strides = [1, 1]} : vector<16x640xf32> to vector<16x128xf32>
    %99 = vector.extract_strided_slice %96 {offsets = [0, 256], sizes = [16, 128], strides = [1, 1]} : vector<16x640xf32> to vector<16x128xf32>
    %100 = vector.extract_strided_slice %96 {offsets = [0, 384], sizes = [16, 128], strides = [1, 1]} : vector<16x640xf32> to vector<16x128xf32>
    %101 = vector.extract_strided_slice %96 {offsets = [0, 512], sizes = [16, 128], strides = [1, 1]} : vector<16x640xf32> to vector<16x128xf32>
    %102 = arith.mulf %97, %99 : vector<16x128xf32>
    %103 = arith.mulf %98, %98 : vector<16x128xf32>
    %104 = arith.subf %102, %103 : vector<16x128xf32>
    %105 = math.absf %104 : vector<16x128xf32>
    %cst_31 = arith.constant 9.99999997E-7 : f32
    %106 = vector.broadcast %cst_31 : f32 to vector<16x128xf32>
    %107 = arith.cmpf ogt, %105, %106 : vector<16x128xf32>
    %cst_32 = arith.constant 1.000000e+00 : f32
    %108 = vector.broadcast %cst_32 : f32 to vector<16x128xf32>
    %109 = arith.select %107, %104, %108 : vector<16x128xi1>, vector<16x128xf32>
    %110 = tpu.reciprocal %109 {approx = true} : vector<16x128xf32> -> vector<16x128xf32>
    %cst_33 = arith.constant 0.000000e+00 : f32
    %111 = vector.broadcast %cst_33 : f32 to vector<16x128xf32>
    %112 = arith.select %107, %110, %111 : vector<16x128xi1>, vector<16x128xf32>
    %cst_34 = arith.constant 0.000000e+00 : f32
    %113 = vector.broadcast %cst_34 : f32 to vector<16x128xf32>
    %114 = arith.subf %113, %99 : vector<16x128xf32>
    %115 = arith.mulf %114, %100 : vector<16x128xf32>
    %116 = arith.mulf %98, %101 : vector<16x128xf32>
    %117 = arith.addf %115, %116 : vector<16x128xf32>
    %118 = arith.mulf %117, %112 : vector<16x128xf32>
    %c0_35 = arith.constant 0 : index
    %c0_36 = arith.constant 0 : index
    %c0_37 = arith.constant 0 : index
    %c0_38 = arith.constant 0 : index
    %119 = vector.load %arg5[%c0_35, %c0_36, %c0_37, %c0_38] : memref<1x2x16x128xf32, #tpu.memory_space<vmem>>, vector<1x1x16x128xf32>
    %120 = vector.shape_cast %119 : vector<1x1x16x128xf32> to vector<16x128xf32>
    %121 = vector.shape_cast %118 : vector<16x128xf32> to vector<1x1x16x128xf32>
    tpu.vector_store %arg5[%c0_35, %c0_36, %c0_37, %c0_38], %121 {strides = array<i32>} : memref<1x2x16x128xf32, #tpu.memory_space<vmem>>, vector<1x1x16x128xf32>,
    %122 = arith.mulf %98, %100 : vector<16x128xf32>
    %123 = arith.mulf %97, %101 : vector<16x128xf32>
    %124 = arith.subf %122, %123 : vector<16x128xf32>
    %125 = arith.mulf %124, %112 : vector<16x128xf32>
    %c0_39 = arith.constant 0 : index
    %c1 = arith.constant 1 : index
    %c0_40 = arith.constant 0 : index
    %c0_41 = arith.constant 0 : index
    %126 = vector.load %arg5[%c0_39, %c1, %c0_40, %c0_41] : memref<1x2x16x128xf32, #tpu.memory_space<vmem>>, vector<1x1x16x128xf32>
    %127 = vector.shape_cast %126 : vector<1x1x16x128xf32> to vector<16x128xf32>
    %128 = vector.shape_cast %125 : vector<16x128xf32> to vector<1x1x16x128xf32>
    tpu.vector_store %arg5[%c0_39, %c1, %c0_40, %c0_41], %128 {strides = array<i32>} : memref<1x2x16x128xf32, #tpu.memory_space<vmem>>, vector<1x1x16x128xf32>,
    return
  }
  func.func @transform_0(%arg0: i32, %arg1: i32) -> (i32, i32, i32) {
    %c0_i32 = arith.constant 0 : i32
    %c0_i32_0 = arith.constant 0 : i32
    %c0_i32_1 = arith.constant 0 : i32
    return %arg1, %c0_i32, %c0_i32_0 : i32, i32, i32
  }
  func.func @transform_3(%arg0: i32, %arg1: i32) -> (i32, i32, i32, i32) {
    %c0_i32 = arith.constant 0 : i32
    %c0_i32_0 = arith.constant 0 : i32
    %c0_i32_1 = arith.constant 0 : i32
    return %arg0, %c0_i32, %arg1, %c0_i32_0 : i32, i32, i32, i32
  }
}

</mosaic_0001>

<llo_original>
// kernel: _forward_impl.4
$region0: #{_forward_impl.4}
  #allocation0 [shape = 'u32[]', space=smem, size = 0x4, offset = 0x4, fixed_abs, tag = 'smem constant byte address 0x4 - core index']
  #allocation1 [shape = 'u32[144,128]{1,0:T(1,128)}', space=vmem, size = 0x12000, scoped, tag = 'internal scratch']
  %s0 = inlined_call_operand.vmem [shape: f32[2,3,64,128], index: 0, kind: input, shape index: {}]
  %s1 = inlined_call_operand.vmem [shape: f32[2,64,128], index: 1, kind: output, shape index: {}]
  %s2 = sld [smem:[#allocation0]]
  $region37: #{_forward_impl.4} parent=0
    _
  %s4 = ssub.s32 1, %s2
  %s5 = scalar_select 0, %s4, %s2
  loop: start=0, step=1, limit=4
  $region2: #{_forward_impl.4} parent=0 // loop_pre_header
    _
  $region3: #{_forward_impl.4} parent=0 // loop_header
    %s7 = sphi 0, %s11
    %p8 = scmp.ge.s32.totalorder %s7, 4
    %s14 = sphi 0, %s26
    %s15 = sphi 0, %s22
    %s16 = sphi 0, %s14
    %s17 = sphi 0, %s15
    %s18 = sphi 0, %s16
    %s19 = sphi 0, %s17
    %s31 = sphi 0, %s33
    %s34 = sphi 0, %s31
    %s35 = sphi 0, %s34
    %s51 = sphi 0, %s35
    %s59 = sphi 0, %s61
    %s62 = sphi 0, %s59
    %s63 = sphi 0, %s62
    %s79 = sphi 0, %s63
  $region4: #{_forward_impl.4} parent=0 // loop_header_branch
    %10 = sbr.rel (%p8) target = $region8
  $region5: #{_forward_impl.4} parent=0 // loop_body
    %s12 = ssub.s32 %s7, 1
    %s13 = ssub.s32 %s7, 2
    %s20 = sadd.s32 1, %s15
    %p21 = scmp.ge.s32.totalorder %s20, 1
    %s22 = scalar_select %p21, 0, %s20
    %s23 = sadd.s32 1, %s14
    %s24 = scalar_select %p21, %s23, %s14
    %p25 = scmp.ge.s32.totalorder %s24, 2
    %s26 = scalar_select %p25, 0, %s24
    %s27 = ssub.s32 %s14, %s26
    %s28 = ssub.s32 %s15, %s22
    %s29 = sor.u32 %s27, %s28
    %p30 = scmp.eq.s32.totalorder %s29, 0
    %s32 = sadd.s32 %s31, 1
    %s33 = scalar_select %p30, %s31, %s32
    %p36 = pneg %p30
    %p37 = scmp.eq.s32.totalorder %s7, 1
    %p38 = por %p36, %p37
    %p39 = scmp.ne.s32.totalorder %s31, %s34
    %p40 = scmp.eq.s32.totalorder %s7, 0
    %p41 = por %p39, %p40
    %p42 = scmp.ne.s32.totalorder %s31, %s34
    %p43 = scmp.eq.s32.totalorder %s12, 1
    %p44 = por %p42, %p43
    %p45 = scmp.ne.s32.totalorder %s34, %s35
    %p46 = scmp.eq.s32.totalorder %s12, 0
    %p47 = por %p45, %p46
    %p48 = scmp.ne.s32.totalorder %s34, %s35
    %p49 = scmp.eq.s32.totalorder %s13, 1
    %p50 = por %p48, %p49
    %p52 = scmp.ne.s32.totalorder %s35, %s51
    %p53 = scmp.eq.s32.totalorder %s13, 0
    %p54 = por %p52, %p53
    %s55 = ssub.s32 %s14, %s26
    %s56 = ssub.s32 %s15, %s22
    %s57 = sor.u32 %s55, %s56
    %p58 = scmp.eq.s32.totalorder %s57, 0
    %s60 = sadd.s32 %s59, 1
    %s61 = scalar_select %p58, %s59, %s60
    %p64 = pneg %p58
    %p65 = scmp.eq.s32.totalorder %s7, 1
    %p66 = por %p64, %p65
    %p67 = scmp.ne.s32.totalorder %s59, %s62
    %p68 = scmp.eq.s32.totalorder %s7, 0
    %p69 = por %p67, %p68
    %p70 = scmp.ne.s32.totalorder %s59, %s62
    %p71 = scmp.eq.s32.totalorder %s12, 1
    %p72 = por %p70, %p71
    %p73 = scmp.ne.s32.totalorder %s62, %s63
    %p74 = scmp.eq.s32.totalorder %s12, 0
    %p75 = por %p73, %p74
    %p76 = scmp.ne.s32.totalorder %s62, %s63
    %p77 = scmp.eq.s32.totalorder %s13, 1
    %p78 = por %p76, %p77
    %p80 = scmp.ne.s32.totalorder %s63, %s79
    %p81 = scmp.eq.s32.totalorder %s13, 0
    %p82 = por %p80, %p81
    %p83 = scmp.le.s32.totalorder 1, %s7
    %p84 = scmp.lt.s32.totalorder %s7, 3
    %p85 = pnand %p83, %p84
    %p86 = pneg %p85
    // Predicated region
    $region9: #{_forward_impl.4} parent=5 // pred_check
      _
    $region10: #{_forward_impl.4} parent=5 // pred_check_branch
      %88 = sbr.rel (%p85) target = $region12
    $region11: #{_forward_impl.4} parent=5 // pred_region
      %s89 = ssub.s32 %s7, 1
    $region12: #{_forward_impl.4} parent=5 // pred_fallthru
      _
    %p90 = scmp.lt.s32.totalorder %s7, 2
    // Predicated region
    $region13: #{_forward_impl.4} parent=5 // pred_check
      %p91 = pneg %p90
    $region14: #{_forward_impl.4} parent=5 // pred_check_branch
      %93 = sbr.rel (%p91) target = $region16
    $region15: #{_forward_impl.4} parent=5 // pred_region
      // Predicated region
      $region17: #{_forward_impl.4} parent=15 // pred_check
        %p94 = pneg %p41
      $region18: #{_forward_impl.4} parent=15 // pred_check_branch
        %96 = sbr.rel (%p94) target = $region20
      $region19: #{_forward_impl.4} parent=15 // pred_region
        %s97 = smul.u32 8, %s15
        %p98 = scmp.lt.s32.totalorder %s14, 1
        %s99 = scalar_select %p98, %s14, 1
        %p100 = scmp.lt.s32.totalorder %s97, 7
        %s101 = scalar_select %p100, %s97, 7
        %s102 = smul.addr %s99, 24
        %s103 = sadd.s32 %s101, %s102
        %s104 = smul.addr %s103, 8
        %s105 = scalar_lea.vmem %s0, %s104
        %s106 = smul.u32 8, %s15
      $region20: #{_forward_impl.4} parent=15 // pred_fallthru
        _
    $region16: #{_forward_impl.4} parent=5 // pred_fallthru
      _
    %p107 = scmp.le.s32.totalorder 1, %s7
    %p108 = scmp.lt.s32.totalorder %s7, 3
    %p109 = pnand %p107, %p108
    %p110 = pneg %p109
    // Predicated region
    $region21: #{_forward_impl.4} parent=5 // pred_check
      _
    $region22: #{_forward_impl.4} parent=5 // pred_check_branch
      %112 = sbr.rel (%p109) target = $region24
    $region23: #{_forward_impl.4} parent=5 // pred_region
      %s113 = ssub.s32 %s7, 1
      %s114 = smul.u32 8, %s17
      %p115 = scmp.lt.s32.totalorder %s16, 1
      %s116 = scalar_select %p115, %s16, 1
      %p117 = scmp.lt.s32.totalorder %s114, 7
      %s118 = scalar_select %p117, %s114, 7
      %s119 = smul.addr %s116, 24
      %s120 = sadd.s32 %s118, %s119
      %s121 = smul.addr %s120, 8
      %s122 = scalar_lea.vmem %s0, %s121
      %p123 = pneg %p47
      %p124 = pneg %p44
      %p125 = pneg %p75
      %p126 = pneg %p72
      %s127 = smul.u32 8, %s17
      %p128 = scmp.lt.s32.totalorder %s16, 1
      %s129 = scalar_select %p128, %s16, 1
      %p130 = scmp.lt.s32.totalorder %s127, 7
      %s131 = scalar_select %p130, %s127, 7
      %s132 = smul.addr %s129, 8
      %s133 = sadd.s32 %s131, %s132
      %s134 = smul.addr %s133, 8
      %s135 = scalar_lea.vmem %s1, %s134
      %s136 = smul.u32 8, %s17
      %p137 = scmp.lt.s32.totalorder %s16, 1
      %s138 = scalar_select %p137, %s16, 1
      %p139 = scmp.lt.s32.totalorder %s136, 7
      %s140 = scalar_select %p139, %s136, 7
      %s141 = smul.addr %s138, 24
      %s142 = sadd.s32 %s140, %s141
      %s143 = smul.addr %s142, 8
      %s144 = scalar_lea.vmem %s0, %s143
      %s145 = smul.u32 8, %s17
      %s146 = smul.u32 8, %s17
      %p147 = scmp.lt.s32.totalorder %s16, 1
      %s148 = scalar_select %p147, %s16, 1
      %p149 = scmp.lt.s32.totalorder %s146, 7
      %s150 = scalar_select %p149, %s146, 7
      %s151 = smul.addr %s148, 8
      %s152 = sadd.s32 %s150, %s151
      %s153 = smul.addr %s152, 8
      %s154 = scalar_lea.vmem %s1, %s153
      %s155 = smul.u32 8, %s17
      %v156 = vld [vmem:[%s144] sm:$0xff]
      %v157 = vld [vmem:[%s144 + $0x8] sm:$0xff]
      %v158 = vld [vmem:[%s144 + $0x10] sm:$0xff]
      %v159 = vld [vmem:[%s144 + $0x18] sm:$0xff]
      %v160 = vld [vmem:[%s144 + $0x20] sm:$0xff]
      %v161 = vld [vmem:[%s144 + $0x28] sm:$0xff]
      %v162 = vld [vmem:[%s144 + $0x30] sm:$0xff]
      %v163 = vld [vmem:[%s144 + $0x38] sm:$0xff]
      %v164 = vmul.f32 %v156, 255.0
      %v165 = vmul.f32 %v157, 255.0
      %v166 = vmul.f32 %v158, 255.0
      %v167 = vmul.f32 %v159, 255.0
      %v168 = vmul.f32 %v160, 255.0
      %v169 = vmul.f32 %v161, 255.0
      %v170 = vmul.f32 %v162, 255.0
      %v171 = vmul.f32 %v163, 255.0
      %v172 = vmax.f32 %v164, 0.0
      %v173 = vmax.f32 %v165, 0.0
      %v174 = vmax.f32 %v166, 0.0
      %v175 = vmax.f32 %v167, 0.0
      %v176 = vmax.f32 %v168, 0.0
      %v177 = vmax.f32 %v169, 0.0
      %v178 = vmax.f32 %v170, 0.0
      %v179 = vmax.f32 %v171, 0.0
      %v180 = vmin.f32 %v172, 255.0
      %v181 = vmin.f32 %v173, 255.0
      %v182 = vmin.f32 %v174, 255.0
      %v183 = vmin.f32 %v175, 255.0
      %v184 = vmin.f32 %v176, 255.0
      %v185 = vmin.f32 %v177, 255.0
      %v186 = vmin.f32 %v178, 255.0
      %v187 = vmin.f32 %v179, 255.0
      %v188 = vfloor.f32 %v180
      %v189 = vfloor.f32 %v181
      %v190 = vfloor.f32 %v182
      %v191 = vfloor.f32 %v183
      %v192 = vfloor.f32 %v184
      %v193 = vfloor.f32 %v185
      %v194 = vfloor.f32 %v186
      %v195 = vfloor.f32 %v187
      %s196 = scalar_lea.vmem %s144, 64
      %v197 = vld [vmem:[%s196] sm:$0xff]
      %v198 = vld [vmem:[%s196 + $0x8] sm:$0xff]
      %v199 = vld [vmem:[%s196 + $0x10] sm:$0xff]
      %v200 = vld [vmem:[%s196 + $0x18] sm:$0xff]
      %v201 = vld [vmem:[%s196 + $0x20] sm:$0xff]
      %v202 = vld [vmem:[%s196 + $0x28] sm:$0xff]
      %v203 = vld [vmem:[%s196 + $0x30] sm:$0xff]
      %v204 = vld [vmem:[%s196 + $0x38] sm:$0xff]
      %v205 = vmul.f32 %v197, 255.0
      %v206 = vmul.f32 %v198, 255.0
      %v207 = vmul.f32 %v199, 255.0
      %v208 = vmul.f32 %v200, 255.0
      %v209 = vmul.f32 %v201, 255.0
      %v210 = vmul.f32 %v202, 255.0
      %v211 = vmul.f32 %v203, 255.0
      %v212 = vmul.f32 %v204, 255.0
      %v213 = vmax.f32 %v205, 0.0
      %v214 = vmax.f32 %v206, 0.0
      %v215 = vmax.f32 %v207, 0.0
      %v216 = vmax.f32 %v208, 0.0
      %v217 = vmax.f32 %v209, 0.0
      %v218 = vmax.f32 %v210, 0.0
      %v219 = vmax.f32 %v211, 0.0
      %v220 = vmax.f32 %v212, 0.0
      %v221 = vmin.f32 %v213, 255.0
      %v222 = vmin.f32 %v214, 255.0
      %v223 = vmin.f32 %v215, 255.0
      %v224 = vmin.f32 %v216, 255.0
      %v225 = vmin.f32 %v217, 255.0
      %v226 = vmin.f32 %v218, 255.0
      %v227 = vmin.f32 %v219, 255.0
      %v228 = vmin.f32 %v220, 255.0
      %v229 = vfloor.f32 %v221
      %v230 = vfloor.f32 %v222
      %v231 = vfloor.f32 %v223
      %v232 = vfloor.f32 %v224
      %v233 = vfloor.f32 %v225
      %v234 = vfloor.f32 %v226
      %v235 = vfloor.f32 %v227
      %v236 = vfloor.f32 %v228
      %s237 = scalar_lea.vmem %s144, 128
      %v238 = vld [vmem:[%s237] sm:$0xff]
      %v239 = vld [vmem:[%s237 + $0x8] sm:$0xff]
      %v240 = vld [vmem:[%s237 + $0x10] sm:$0xff]
      %v241 = vld [vmem:[%s237 + $0x18] sm:$0xff]
      %v242 = vld [vmem:[%s237 + $0x20] sm:$0xff]
      %v243 = vld [vmem:[%s237 + $0x28] sm:$0xff]
      %v244 = vld [vmem:[%s237 + $0x30] sm:$0xff]
      %v245 = vld [vmem:[%s237 + $0x38] sm:$0xff]
      %v246 = vmul.f32 %v238, 255.0
      %v247 = vmul.f32 %v239, 255.0
      %v248 = vmul.f32 %v240, 255.0
      %v249 = vmul.f32 %v241, 255.0
      %v250 = vmul.f32 %v242, 255.0
      %v251 = vmul.f32 %v243, 255.0
      %v252 = vmul.f32 %v244, 255.0
      %v253 = vmul.f32 %v245, 255.0
      %v254 = vmax.f32 %v246, 0.0
      %v255 = vmax.f32 %v247, 0.0
      %v256 = vmax.f32 %v248, 0.0
      %v257 = vmax.f32 %v249, 0.0
      %v258 = vmax.f32 %v250, 0.0
      %v259 = vmax.f32 %v251, 0.0
      %v260 = vmax.f32 %v252, 0.0
      %v261 = vmax.f32 %v253, 0.0
      %v262 = vmin.f32 %v254, 255.0
      %v263 = vmin.f32 %v255, 255.0
      %v264 = vmin.f32 %v256, 255.0
      %v265 = vmin.f32 %v257, 255.0
      %v266 = vmin.f32 %v258, 255.0
      %v267 = vmin.f32 %v259, 255.0
      %v268 = vmin.f32 %v260, 255.0
      %v269 = vmin.f32 %v261, 255.0
      %v270 = vfloor.f32 %v262
      %v271 = vfloor.f32 %v263
      %v272 = vfloor.f32 %v264
      %v273 = vfloor.f32 %v265
      %v274 = vfloor.f32 %v266
      %v275 = vfloor.f32 %v267
      %v276 = vfloor.f32 %v268
      %v277 = vfloor.f32 %v269
      %v278 = vmul.f32 %v188, 4899.0
      %v279 = vmul.f32 %v189, 4899.0
      %v280 = vmul.f32 %v190, 4899.0
      %v281 = vmul.f32 %v191, 4899.0
      %v282 = vmul.f32 %v192, 4899.0
      %v283 = vmul.f32 %v193, 4899.0
      %v284 = vmul.f32 %v194, 4899.0
      %v285 = vmul.f32 %v195, 4899.0
      %v286 = vmul.f32 %v229, 9617.0
      %v287 = vmul.f32 %v230, 9617.0
      %v288 = vmul.f32 %v231, 9617.0
      %v289 = vmul.f32 %v232, 9617.0
      %v290 = vmul.f32 %v233, 9617.0
      %v291 = vmul.f32 %v234, 9617.0
      %v292 = vmul.f32 %v235, 9617.0
      %v293 = vmul.f32 %v236, 9617.0
      %v294 = vadd.f32 %v278, %v286
      %v295 = vadd.f32 %v279, %v287
      %v296 = vadd.f32 %v280, %v288
      %v297 = vadd.f32 %v281, %v289
      %v298 = vadd.f32 %v282, %v290
      %v299 = vadd.f32 %v283, %v291
      %v300 = vadd.f32 %v284, %v292
      %v301 = vadd.f32 %v285, %v293
      %v302 = vmul.f32 %v270, 1868.0
      %v303 = vmul.f32 %v271, 1868.0
      %v304 = vmul.f32 %v272, 1868.0
      %v305 = vmul.f32 %v273, 1868.0
      %v306 = vmul.f32 %v274, 1868.0
      %v307 = vmul.f32 %v275, 1868.0
      %v308 = vmul.f32 %v276, 1868.0
      %v309 = vmul.f32 %v277, 1868.0
      %v310 = vadd.f32 %v294, %v302
      %v311 = vadd.f32 %v295, %v303
      %v312 = vadd.f32 %v296, %v304
      %v313 = vadd.f32 %v297, %v305
      %v314 = vadd.f32 %v298, %v306
      %v315 = vadd.f32 %v299, %v307
      %v316 = vadd.f32 %v300, %v308
      %v317 = vadd.f32 %v301, %v309
      %v318 = vadd.f32 %v310, 8192.0
      %v319 = vadd.f32 %v311, 8192.0
      %v320 = vadd.f32 %v312, 8192.0
      %v321 = vadd.f32 %v313, 8192.0
      %v322 = vadd.f32 %v314, 8192.0
      %v323 = vadd.f32 %v315, 8192.0
      %v324 = vadd.f32 %v316, 8192.0
      %v325 = vadd.f32 %v317, 8192.0
      %v326 = vmul.f32 %v318, 6.1035156e-05
      %v327 = vmul.f32 %v319, 6.1035156e-05
      %v328 = vmul.f32 %v320, 6.1035156e-05
      %v329 = vmul.f32 %v321, 6.1035156e-05
      %v330 = vmul.f32 %v322, 6.1035156e-05
      %v331 = vmul.f32 %v323, 6.1035156e-05
      %v332 = vmul.f32 %v324, 6.1035156e-05
      %v333 = vmul.f32 %v325, 6.1035156e-05
      %v334 = vfloor.f32 %v326
      %v335 = vfloor.f32 %v327
      %v336 = vfloor.f32 %v328
      %v337 = vfloor.f32 %v329
      %v338 = vfloor.f32 %v330
      %v339 = vfloor.f32 %v331
      %v340 = vfloor.f32 %v332
      %v341 = vfloor.f32 %v333
      %342 = vst [vmem:[%s154] sm:$0xff] %v334
      %343 = vst [vmem:[%s154 + $0x8] sm:$0xff] %v335
      %344 = vst [vmem:[%s154 + $0x10] sm:$0xff] %v336
      %345 = vst [vmem:[%s154 + $0x18] sm:$0xff] %v337
      %346 = vst [vmem:[%s154 + $0x20] sm:$0xff] %v338
      %347 = vst [vmem:[%s154 + $0x28] sm:$0xff] %v339
      %348 = vst [vmem:[%s154 + $0x30] sm:$0xff] %v340
      %349 = vst [vmem:[%s154 + $0x38] sm:$0xff] %v341
      %s350 = smul.u32 8, %s17
      %p351 = scmp.lt.s32.totalorder %s16, 1
      %s352 = scalar_select %p351, %s16, 1
      %p353 = scmp.lt.s32.totalorder %s350, 7
      %s354 = scalar_select %p353, %s350, 7
      %s355 = smul.addr %s352, 8
      %s356 = sadd.s32 %s354, %s355
      %s357 = smul.addr %s356, 8
      %s358 = scalar_lea.vmem %s1, %s357
      // Predicated region
      $region25: #{_forward_impl.4} parent=23 // pred_check
        %p359 = pneg %p72
      $region26: #{_forward_impl.4} parent=23 // pred_check_branch
        %361 = sbr.rel (%p359) target = $region28
      $region27: #{_forward_impl.4} parent=23 // pred_region
        %s362 = smul.u32 8, %s17
      $region28: #{_forward_impl.4} parent=23 // pred_fallthru
        _
    $region24: #{_forward_impl.4} parent=5 // pred_fallthru
      _
    %p363 = scmp.le.s32.totalorder 2, %s7
    // Predicated region
    $region29: #{_forward_impl.4} parent=5 // pred_check
      %p364 = pneg %p363
    $region30: #{_forward_impl.4} parent=5 // pred_check_branch
      %366 = sbr.rel (%p364) target = $region32
    $region31: #{_forward_impl.4} parent=5 // pred_region
      %s367 = ssub.s32 %s7, 2
      // Predicated region
      $region33: #{_forward_impl.4} parent=31 // pred_check
        %p368 = pneg %p78
      $region34: #{_forward_impl.4} parent=31 // pred_check_branch
        %370 = sbr.rel (%p368) target = $region36
      $region35: #{_forward_impl.4} parent=31 // pred_region
        %s371 = smul.u32 8, %s19
        %p372 = scmp.lt.s32.totalorder %s18, 1
        %s373 = scalar_select %p372, %s18, 1
        %p374 = scmp.lt.s32.totalorder %s371, 7
        %s375 = scalar_select %p374, %s371, 7
        %s376 = smul.addr %s373, 8
        %s377 = sadd.s32 %s375, %s376
        %s378 = smul.addr %s377, 8
        %s379 = scalar_lea.vmem %s1, %s378
      $region36: #{_forward_impl.4} parent=31 // pred_fallthru
        _
    $region32: #{_forward_impl.4} parent=5 // pred_fallthru
      _
  $region6: #{_forward_impl.4} parent=0 // loop_footer
    %s11 = sadd.s32 1, %s7
  $region7: #{_forward_impl.4} parent=0 // loop_footer_branch
    %6 = sbr.rel target = $region3
  $region8: #{_forward_impl.4} parent=0 // loop_exit
    _

// kernel: _forward_impl.5
$region0: #{_forward_impl.5}
  #allocation0 [shape = 'u32[]', space=smem, size = 0x4, offset = 0x4, fixed_abs, tag = 'smem constant byte address 0x4 - core index']
  #allocation1 [shape = 'u32[144,128]{1,0:T(1,128)}', space=vmem, size = 0x12000, scoped, tag = 'internal scratch']
  #allocation2 [shape = 'f32[2,32,128]{2,1,0:T(8,128)}', space=vmem, size = 0x8000, scoped, tag = 'scratch operand']
  #allocation3 [shape = 'f32[2,32,128]{2,1,0:T(8,128)}', space=vmem, size = 0x8000, scoped, tag = 'scratch operand']
  #allocation4 [shape = 's32[4]{0}', space=sflag, size = 0x10, scoped, tag = 'scratch operand']
  #allocation7 [shape = 's32[]', space=sflag, size = 0x4, offset = 0, fixed_abs, tag = 'sflag constant byte address 0x0 - dummy sync flag']
  #allocation8 [shape = 's32[]', space=sflag, size = 0x4, offset = 0, fixed_abs, tag = 'sflag constant byte address 0x0 - dummy sync flag']
  #allocation9 [shape = 's32[]', space=sflag, size = 0x4, offset = 0, fixed_abs, tag = 'sflag constant byte address 0x0 - dummy sync flag']
  #allocation10 [shape = 's32[]', space=sflag, size = 0x4, offset = 0, fixed_abs, tag = 'sflag constant byte address 0x0 - dummy sync flag']
  %s0 = inlined_call_operand.vmem [shape: f32[1,16,32], index: 0, kind: input, shape index: {}]
  %s1 = inlined_call_operand.vmem [shape: f32[2,64,128], index: 1, kind: input, shape index: {}]
  %s2 = inlined_call_operand.vmem [shape: f32[2,64,128], index: 2, kind: input, shape index: {}]
  %s3 = inlined_call_operand.hbm [shape: f32[2,2,16,128], index: 3, kind: output, shape index: {}]
  %s4 = sld [smem:[#allocation0]]
  $region181: #{_forward_impl.5} parent=0
    _
  %s6 = ssub.s32 1, %s4
  %s7 = scalar_select 0, %s6, %s4
  $region1: #{_forward_impl.5} parent=0
    #allocation5 [shape = 'u8[32768]{0}', space=vmem, size = 0x8000, scoped, tag = 'output window, operand 0']
    #allocation6 [shape = 's32[2]{0}', space=sflag, size = 0x8, scoped, tag = 'scoped memory for _forward_impl.5']
    %8 = vsyncpa [#allocation6], 0
    %s9 = scalar_lea.sflag [#allocation6], 1
    %10 = vsyncpa %s9, 0
    loop: start=0, step=1, limit=4
    $region2: #{_forward_impl.5} parent=1 // loop_pre_header
      _
    $region3: #{_forward_impl.5} parent=1 // loop_header
      %s12 = sphi 0, %s16
      %p13 = scmp.ge.s32.totalorder %s12, 4
      %s19 = sphi 0, %s31
      %s20 = sphi 0, %s27
      %s21 = sphi 0, %s19
      %s22 = sphi 0, %s20
      %s23 = sphi 0, %s21
      %s24 = sphi 0, %s22
      %s34 = sphi 0, %s36
      %s37 = sphi 0, %s34
      %s38 = sphi 0, %s37
      %s54 = sphi 0, %s38
      %s62 = sphi 0, %s64
      %s65 = sphi 0, %s62
      %s66 = sphi 0, %s65
      %s82 = sphi 0, %s66
    $region4: #{_forward_impl.5} parent=1 // loop_header_branch
      %15 = sbr.rel (%p13) target = $region8
    $region5: #{_forward_impl.5} parent=1 // loop_body
      %s17 = ssub.s32 %s12, 1
      %s18 = ssub.s32 %s12, 2
      %s25 = sadd.s32 1, %s20
      %p26 = scmp.ge.s32.totalorder %s25, 1
      %s27 = scalar_select %p26, 0, %s25
      %s28 = sadd.s32 1, %s19
      %s29 = scalar_select %p26, %s28, %s19
      %p30 = scmp.ge.s32.totalorder %s29, 2
      %s31 = scalar_select %p30, 0, %s29
      %s32 = ssub.s32 %s20, %s27
      %p33 = scmp.eq.s32.totalorder %s32, 0
      %s35 = sadd.s32 %s34, 1
      %s36 = scalar_select %p33, %s34, %s35
      %p39 = pneg %p33
      %p40 = scmp.eq.s32.totalorder %s12, 1
      %p41 = por %p39, %p40
      %p42 = scmp.ne.s32.totalorder %s34, %s37
      %p43 = scmp.eq.s32.totalorder %s12, 0
      %p44 = por %p42, %p43
      %p45 = scmp.ne.s32.totalorder %s34, %s37
      %p46 = scmp.eq.s32.totalorder %s17, 1
      %p47 = por %p45, %p46
      %p48 = scmp.ne.s32.totalorder %s37, %s38
      %p49 = scmp.eq.s32.totalorder %s17, 0
      %p50 = por %p48, %p49
      %p51 = scmp.ne.s32.totalorder %s37, %s38
      %p52 = scmp.eq.s32.totalorder %s18, 1
      %p53 = por %p51, %p52
      %p55 = scmp.ne.s32.totalorder %s38, %s54
      %p56 = scmp.eq.s32.totalorder %s18, 0
      %p57 = por %p55, %p56
      %s58 = ssub.s32 %s19, %s31
      %s59 = ssub.s32 %s20, %s27
      %s60 = sor.u32 %s58, %s59
      %p61 = scmp.eq.s32.totalorder %s60, 0
      %s63 = sadd.s32 %s62, 1
      %s64 = scalar_select %p61, %s62, %s63
      %p67 = pneg %p61
      %p68 = scmp.eq.s32.totalorder %s12, 1
      %p69 = por %p67, %p68
      %p70 = scmp.ne.s32.totalorder %s62, %s65
      %p71 = scmp.eq.s32.totalorder %s12, 0
      %p72 = por %p70, %p71
      %p73 = scmp.ne.s32.totalorder %s62, %s65
      %p74 = scmp.eq.s32.totalorder %s17, 1
      %p75 = por %p73, %p74
      %p76 = scmp.ne.s32.totalorder %s65, %s66
      %p77 = scmp.eq.s32.totalorder %s17, 0
      %p78 = por %p76, %p77
      %p79 = scmp.ne.s32.totalorder %s65, %s66
      %p80 = scmp.eq.s32.totalorder %s18, 1
      %p81 = por %p79, %p80
      %p83 = scmp.ne.s32.totalorder %s66, %s82
      %p84 = scmp.eq.s32.totalorder %s18, 0
      %p85 = por %p83, %p84
      %p86 = scmp.le.s32.totalorder 1, %s12
      %p87 = scmp.lt.s32.totalorder %s12, 3
      %p88 = pnand %p86, %p87
      %p89 = pneg %p88
      // Predicated region
      $region9: #{_forward_impl.5} parent=5 // pred_check
        _
      $region10: #{_forward_impl.5} parent=5 // pred_check_branch
        %91 = sbr.rel (%p88) target = $region12
      $region11: #{_forward_impl.5} parent=5 // pred_region
        %s92 = ssub.s32 %s12, 1
        // Predicated region
        $region13: #{_forward_impl.5} parent=11 // pred_check
          %p93 = pneg %p50
        $region14: #{_forward_impl.5} parent=11 // pred_check_branch
          %95 = sbr.rel (%p93) target = $region16
        $region15: #{_forward_impl.5} parent=11 // pred_region
          %p96 = scmp.lt.s32.totalorder %s22, 0
          %s97 = scalar_select %p96, %s22, 0
          %s98 = smul.addr %s97, 2
          %s99 = smul.addr %s98, 8
          %s100 = scalar_lea.vmem %s0, %s99
        $region16: #{_forward_impl.5} parent=11 // pred_fallthru
          _
      $region12: #{_forward_impl.5} parent=5 // pred_fallthru
        _
      %p101 = scmp.lt.s32.totalorder %s12, 2
      // Predicated region
      $region17: #{_forward_impl.5} parent=5 // pred_check
        %p102 = pneg %p101
      $region18: #{_forward_impl.5} parent=5 // pred_check_branch
        %104 = sbr.rel (%p102) target = $region20
      $region19: #{_forward_impl.5} parent=5 // pred_region
        _
      $region20: #{_forward_impl.5} parent=5 // pred_fallthru
        _
      %p105 = scmp.le.s32.totalorder 1, %s12
      %p106 = scmp.lt.s32.totalorder %s12, 3
      %p107 = pnand %p105, %p106
      %p108 = pneg %p107
      // Predicated region
      $region21: #{_forward_impl.5} parent=5 // pred_check
        _
      $region22: #{_forward_impl.5} parent=5 // pred_check_branch
        %110 = sbr.rel (%p107) target = $region24
      $region23: #{_forward_impl.5} parent=5 // pred_region
        %s111 = ssub.s32 %s12, 1
        %p112 = scmp.lt.s32.totalorder %s22, 0
        %s113 = scalar_select %p112, %s22, 0
        %s114 = smul.addr %s113, 2
        %s115 = smul.addr %s114, 8
        %s116 = scalar_lea.vmem %s0, %s115
        %p117 = pneg %p50
        %p118 = pneg %p47
        %p119 = pneg %p78
        %p120 = pneg %p75
        %s121 = sand.u32 %s65, 1
        %s122 = scalar_lea.sflag [#allocation6], %s121
        %s123 = sand.u32 %s65, 1
        %s124 = smul.addr %s123, 32
        %s125 = scalar_lea.vmem [#allocation5], %s124
        %p126 = scmp.lt.s32.totalorder %s22, 0
        %s127 = scalar_select %p126, %s22, 0
        %s128 = smul.addr %s127, 2
        %s129 = smul.addr %s128, 8
        %s130 = scalar_lea.vmem %s0, %s129
        %s131 = smul.u32 2, %s22
        %p132 = scmp.lt.s32.totalorder %s22, 0
        %s133 = ssub.s32 0, %s22
        %s134 = scalar_select %p132, %s133, %s22
        %s135 = sand.u32 %s134, 1
        %s136 = ssub.s32 0, %s135
        %s137 = scalar_select %p132, %s136, %s135
        %p138 = scmp.ne.s32.totalorder %s137, 0
        %p139 = scmp.lt.s32.totalorder %s137, 0
        %p140 = pnand %p139, %p138
        %p141 = pneg %p140
        %s142 = sadd.s32 %s137, 2
        %s143 = scalar_select %p141, %s142, %s137
        %p144 = scmp.eq.s32.totalorder %s22, 0
        // Predicated region
        $region25: #{_forward_impl.5} parent=23 // pred_check
          %p145 = pneg %p144
        $region26: #{_forward_impl.5} parent=23 // pred_check_branch
          %147 = sbr.rel (%p145) target = $region28
        $region27: #{_forward_impl.5} parent=23 // pred_region
          %s148 = smul.u32 %s21, 64
          %s149 = sadd.s32 0, %s148
          %s150 = scalar_lea.vmem %s1, %s149
          %p152 = scmp.lt.u32.totalorder 32, 8
          %p153 = pneg %p152
          // Predicated region
          $region29: #{_forward_impl.5} parent=27 // pred_check
            _
          $region30: #{_forward_impl.5} parent=27 // pred_check_branch
            %155 = sbr.rel (%p152) target = $region32
          $region31: #{_forward_impl.5} parent=27 // pred_region
            %s170 = sand.u32 32, 7
            %p171 = scmp.eq.s32.totalorder %s170, 0
            // Predicated region
            $region44: #{_forward_impl.5} parent=31 // pred_check
              %p172 = pneg %p171
            $region45: #{_forward_impl.5} parent=31 // pred_check_branch
              %174 = sbr.rel (%p172) target = $region47
            $region46: #{_forward_impl.5} parent=31 // pred_region
              loop: start=0, step=1, limit=1
              $region48: #{_forward_impl.5} parent=46 // loop_pre_header
                _
              $region49: #{_forward_impl.5} parent=46 // loop_header
                %s176 = sphi 0, %s180
                %p177 = scmp.ge.s32.totalorder %s176, 1
                %s181 = sphi %s150, %s150
                %s182 = sphi [#allocation2], [#allocation2]
              $region50: #{_forward_impl.5} parent=46 // loop_header_branch
                %179 = sbr.rel (%p177) target = $region54
              $region51: #{_forward_impl.5} parent=46 // loop_body
                %v183 = vld [vmem:[%s181] sm:$0xff]
                %184 = vst [vmem:[%s182] sm:$0xff] %v183
                %v185 = vld [vmem:[%s181 + $0x8] sm:$0xff]
                %186 = vst [vmem:[%s182 + $0x8] sm:$0xff] %v185
                %v187 = vld [vmem:[%s181 + $0x10] sm:$0xff]
                %188 = vst [vmem:[%s182 + $0x10] sm:$0xff] %v187
                %v189 = vld [vmem:[%s181 + $0x18] sm:$0xff]
                %190 = vst [vmem:[%s182 + $0x18] sm:$0xff] %v189
              $region52: #{_forward_impl.5} parent=46 // loop_footer
                %s180 = sadd.s32 1, %s176
              $region53: #{_forward_impl.5} parent=46 // loop_footer_branch
                %175 = sbr.rel target = $region49
              $region54: #{_forward_impl.5} parent=46 // loop_exit
                _
            $region47: #{_forward_impl.5} parent=31 // pred_fallthru
              _
            %p191 = pneg %p171
            // Predicated region
            $region55: #{_forward_impl.5} parent=31 // pred_check
              _
            $region56: #{_forward_impl.5} parent=31 // pred_check_branch
              %193 = sbr.rel (%p171) target = $region58
            $region57: #{_forward_impl.5} parent=31 // pred_region
              %s194 = sand.u32 32, 7
            $region58: #{_forward_impl.5} parent=31 // pred_fallthru
              _
          $region32: #{_forward_impl.5} parent=27 // pred_fallthru
            _
          // Predicated region
          $region33: #{_forward_impl.5} parent=27 // pred_check
            %p156 = pneg %p152
          $region34: #{_forward_impl.5} parent=27 // pred_check_branch
            %158 = sbr.rel (%p156) target = $region36
          $region35: #{_forward_impl.5} parent=27 // pred_region
            %s159 = sshllo.u32 0, 32
            loop: start=0, step=1, limit=1
            $region37: #{_forward_impl.5} parent=35 // loop_pre_header
              _
            $region38: #{_forward_impl.5} parent=35 // loop_header
              %s161 = sphi 0, %s165
              %p162 = scmp.ge.s32.totalorder %s161, 1
              %s166 = sphi %s150, %s150
              %s167 = sphi [#allocation2], [#allocation2]
            $region39: #{_forward_impl.5} parent=35 // loop_header_branch
              %164 = sbr.rel (%p162) target = $region43
            $region40: #{_forward_impl.5} parent=35 // loop_body
              %v168 = vld [vmem:[%s166] sm:%s159]
              %169 = vst [vmem:[%s167] sm:%s159] %v168
            $region41: #{_forward_impl.5} parent=35 // loop_footer
              %s165 = sadd.s32 1, %s161
            $region42: #{_forward_impl.5} parent=35 // loop_footer_branch
              %160 = sbr.rel target = $region38
            $region43: #{_forward_impl.5} parent=35 // loop_exit
              _
          $region36: #{_forward_impl.5} parent=27 // pred_fallthru
            _
          // Predicated region
          $region59: #{_forward_impl.5} parent=27 // pred_check
            _
          $region60: #{_forward_impl.5} parent=27 // pred_check_branch
            %197 = sbr.rel (0) target = $region62
          $region61: #{_forward_impl.5} parent=27 // pred_region
            %198 = vsyncadd [#allocation4], 512
          $region62: #{_forward_impl.5} parent=27 // pred_fallthru
            _
          %s199 = scalar_lea.vmem %s2, %s149
          %s200 = scalar_lea.sflag [#allocation4], 2
          %p202 = scmp.lt.u32.totalorder 32, 8
          %p203 = pneg %p202
          // Predicated region
          $region63: #{_forward_impl.5} parent=27 // pred_check
            _
          $region64: #{_forward_impl.5} parent=27 // pred_check_branch
            %205 = sbr.rel (%p202) target = $region66
          $region65: #{_forward_impl.5} parent=27 // pred_region
            %s220 = sand.u32 32, 7
            %p221 = scmp.eq.s32.totalorder %s220, 0
            // Predicated region
            $region78: #{_forward_impl.5} parent=65 // pred_check
              %p222 = pneg %p221
            $region79: #{_forward_impl.5} parent=65 // pred_check_branch
              %224 = sbr.rel (%p222) target = $region81
            $region80: #{_forward_impl.5} parent=65 // pred_region
              loop: start=0, step=1, limit=1
              $region82: #{_forward_impl.5} parent=80 // loop_pre_header
                _
              $region83: #{_forward_impl.5} parent=80 // loop_header
                %s226 = sphi 0, %s230
                %p227 = scmp.ge.s32.totalorder %s226, 1
                %s231 = sphi %s199, %s199
                %s232 = sphi [#allocation3], [#allocation3]
              $region84: #{_forward_impl.5} parent=80 // loop_header_branch
                %229 = sbr.rel (%p227) target = $region88
              $region85: #{_forward_impl.5} parent=80 // loop_body
                %v233 = vld [vmem:[%s231] sm:$0xff]
                %234 = vst [vmem:[%s232] sm:$0xff] %v233
                %v235 = vld [vmem:[%s231 + $0x8] sm:$0xff]
                %236 = vst [vmem:[%s232 + $0x8] sm:$0xff] %v235
                %v237 = vld [vmem:[%s231 + $0x10] sm:$0xff]
                %238 = vst [vmem:[%s232 + $0x10] sm:$0xff] %v237
                %v239 = vld [vmem:[%s231 + $0x18] sm:$0xff]
                %240 = vst [vmem:[%s232 + $0x18] sm:$0xff] %v239
              $region86: #{_forward_impl.5} parent=80 // loop_footer
                %s230 = sadd.s32 1, %s226
              $region87: #{_forward_impl.5} parent=80 // loop_footer_branch
                %225 = sbr.rel target = $region83
              $region88: #{_forward_impl.5} parent=80 // loop_exit
                _
            $region81: #{_forward_impl.5} parent=65 // pred_fallthru
              _
            %p241 = pneg %p221
            // Predicated region
            $region89: #{_forward_impl.5} parent=65 // pred_check
              _
            $region90: #{_forward_impl.5} parent=65 // pred_check_branch
              %243 = sbr.rel (%p221) target = $region92
            $region91: #{_forward_impl.5} parent=65 // pred_region
              %s244 = sand.u32 32, 7
            $region92: #{_forward_impl.5} parent=65 // pred_fallthru
              _
          $region66: #{_forward_impl.5} parent=27 // pred_fallthru
            _
          // Predicated region
          $region67: #{_forward_impl.5} parent=27 // pred_check
            %p206 = pneg %p202
          $region68: #{_forward_impl.5} parent=27 // pred_check_branch
            %208 = sbr.rel (%p206) target = $region70
          $region69: #{_forward_impl.5} parent=27 // pred_region
            %s209 = sshllo.u32 0, 32
            loop: start=0, step=1, limit=1
            $region71: #{_forward_impl.5} parent=69 // loop_pre_header
              _
            $region72: #{_forward_impl.5} parent=69 // loop_header
              %s211 = sphi 0, %s215
              %p212 = scmp.ge.s32.totalorder %s211, 1
              %s216 = sphi %s199, %s199
              %s217 = sphi [#allocation3], [#allocation3]
            $region73: #{_forward_impl.5} parent=69 // loop_header_branch
              %214 = sbr.rel (%p212) target = $region77
            $region74: #{_forward_impl.5} parent=69 // loop_body
              %v218 = vld [vmem:[%s216] sm:%s209]
              %219 = vst [vmem:[%s217] sm:%s209] %v218
            $region75: #{_forward_impl.5} parent=69 // loop_footer
              %s215 = sadd.s32 1, %s211
            $region76: #{_forward_impl.5} parent=69 // loop_footer_branch
              %210 = sbr.rel target = $region72
            $region77: #{_forward_impl.5} parent=69 // loop_exit
              _
          $region70: #{_forward_impl.5} parent=27 // pred_fallthru
            _
          // Predicated region
          $region93: #{_forward_impl.5} parent=27 // pred_check
            _
          $region94: #{_forward_impl.5} parent=27 // pred_check_branch
            %247 = sbr.rel (0) target = $region96
          $region95: #{_forward_impl.5} parent=27 // pred_region
            %248 = vsyncadd %s200, 512
          $region96: #{_forward_impl.5} parent=27 // pred_fallthru
            _
        $region28: #{_forward_impl.5} parent=23 // pred_fallthru
          _
        %s249 = smul.u32 %s143, 32
        %s250 = scalar_lea.vmem [#allocation2], %s249
        %s251 = scalar_lea.sflag [#allocation4], %s143
        %s252 = smul.u32 32, 1
        %s253 = sshll.u32 %s252, 4
        %254 = dma.done %s251, %s253
        %s255 = scalar_lea.vmem [#allocation3], %s249
        %s256 = sadd.s32 %s143, 2
        %s257 = scalar_lea.sflag [#allocation4], %s256
        %s258 = sshll.u32 %s252, 4
        %259 = dma.done %s257, %s258
        %s260 = sadd.s32 %s22, 1
        %p261 = scmp.lt.s32.totalorder %s260, 1
        // Predicated region
        $region97: #{_forward_impl.5} parent=23 // pred_check
          %p262 = pneg %p261
        $region98: #{_forward_impl.5} parent=23 // pred_check_branch
          %264 = sbr.rel (%p262) target = $region100
        $region99: #{_forward_impl.5} parent=23 // pred_region
          %s265 = ssub.s32 1, %s143
          %s266 = smul.u32 %s260, 16
          %s267 = smul.u32 %s21, 64
          %s268 = sadd.s32 %s266, %s267
          %s269 = scalar_lea.vmem %s1, %s268
          %s270 = smul.u32 %s265, 32
          %s271 = scalar_lea.vmem [#allocation2], %s270
          %s272 = scalar_lea.sflag [#allocation4], %s265
          %p274 = scmp.lt.u32.totalorder 32, 8
          %p275 = pneg %p274
          // Predicated region
          $region101: #{_forward_impl.5} parent=99 // pred_check
            _
          $region102: #{_forward_impl.5} parent=99 // pred_check_branch
            %277 = sbr.rel (%p274) target = $region104
          $region103: #{_forward_impl.5} parent=99 // pred_region
            %s292 = sand.u32 32, 7
            %p293 = scmp.eq.s32.totalorder %s292, 0
            // Predicated region
            $region116: #{_forward_impl.5} parent=103 // pred_check
              %p294 = pneg %p293
            $region117: #{_forward_impl.5} parent=103 // pred_check_branch
              %296 = sbr.rel (%p294) target = $region119
            $region118: #{_forward_impl.5} parent=103 // pred_region
              loop: start=0, step=1, limit=1
              $region120: #{_forward_impl.5} parent=118 // loop_pre_header
                _
              $region121: #{_forward_impl.5} parent=118 // loop_header
                %s298 = sphi 0, %s302
                %p299 = scmp.ge.s32.totalorder %s298, 1
                %s303 = sphi %s269, %s269
                %s304 = sphi %s271, %s271
              $region122: #{_forward_impl.5} parent=118 // loop_header_branch
                %301 = sbr.rel (%p299) target = $region126
              $region123: #{_forward_impl.5} parent=118 // loop_body
                %v305 = vld [vmem:[%s303] sm:$0xff]
                %306 = vst [vmem:[%s304] sm:$0xff] %v305
                %v307 = vld [vmem:[%s303 + $0x8] sm:$0xff]
                %308 = vst [vmem:[%s304 + $0x8] sm:$0xff] %v307
                %v309 = vld [vmem:[%s303 + $0x10] sm:$0xff]
                %310 = vst [vmem:[%s304 + $0x10] sm:$0xff] %v309
                %v311 = vld [vmem:[%s303 + $0x18] sm:$0xff]
                %312 = vst [vmem:[%s304 + $0x18] sm:$0xff] %v311
              $region124: #{_forward_impl.5} parent=118 // loop_footer
                %s302 = sadd.s32 1, %s298
              $region125: #{_forward_impl.5} parent=118 // loop_footer_branch
                %297 = sbr.rel target = $region121
              $region126: #{_forward_impl.5} parent=118 // loop_exit
                _
            $region119: #{_forward_impl.5} parent=103 // pred_fallthru
              _
            %p313 = pneg %p293
            // Predicated region
            $region127: #{_forward_impl.5} parent=103 // pred_check
              _
            $region128: #{_forward_impl.5} parent=103 // pred_check_branch
              %315 = sbr.rel (%p293) target = $region130
            $region129: #{_forward_impl.5} parent=103 // pred_region
              %s316 = sand.u32 32, 7
            $region130: #{_forward_impl.5} parent=103 // pred_fallthru
              _
          $region104: #{_forward_impl.5} parent=99 // pred_fallthru
            _
          // Predicated region
          $region105: #{_forward_impl.5} parent=99 // pred_check
            %p278 = pneg %p274
          $region106: #{_forward_impl.5} parent=99 // pred_check_branch
            %280 = sbr.rel (%p278) target = $region108
          $region107: #{_forward_impl.5} parent=99 // pred_region
            %s281 = sshllo.u32 0, 32
            loop: start=0, step=1, limit=1
            $region109: #{_forward_impl.5} parent=107 // loop_pre_header
              _
            $region110: #{_forward_impl.5} parent=107 // loop_header
              %s283 = sphi 0, %s287
              %p284 = scmp.ge.s32.totalorder %s283, 1
              %s288 = sphi %s269, %s269
              %s289 = sphi %s271, %s271
            $region111: #{_forward_impl.5} parent=107 // loop_header_branch
              %286 = sbr.rel (%p284) target = $region115
            $region112: #{_forward_impl.5} parent=107 // loop_body
              %v290 = vld [vmem:[%s288] sm:%s281]
              %291 = vst [vmem:[%s289] sm:%s281] %v290
            $region113: #{_forward_impl.5} parent=107 // loop_footer
              %s287 = sadd.s32 1, %s283
            $region114: #{_forward_impl.5} parent=107 // loop_footer_branch
              %282 = sbr.rel target = $region110
            $region115: #{_forward_impl.5} parent=107 // loop_exit
              _
          $region108: #{_forward_impl.5} parent=99 // pred_fallthru
            _
          // Predicated region
          $region131: #{_forward_impl.5} parent=99 // pred_check
            _
          $region132: #{_forward_impl.5} parent=99 // pred_check_branch
            %319 = sbr.rel (0) target = $region134
          $region133: #{_forward_impl.5} parent=99 // pred_region
            %320 = vsyncadd %s272, 512
          $region134: #{_forward_impl.5} parent=99 // pred_fallthru
            _
          %s321 = scalar_lea.vmem %s2, %s268
          %s322 = scalar_lea.vmem [#allocation3], %s270
          %s323 = sadd.s32 %s265, 2
          %s324 = scalar_lea.sflag [#allocation4], %s323
          %p326 = scmp.lt.u32.totalorder 32, 8
          %p327 = pneg %p326
          // Predicated region
          $region135: #{_forward_impl.5} parent=99 // pred_check
            _
          $region136: #{_forward_impl.5} parent=99 // pred_check_branch
            %329 = sbr.rel (%p326) target = $region138
          $region137: #{_forward_impl.5} parent=99 // pred_region
            %s344 = sand.u32 32, 7
            %p345 = scmp.eq.s32.totalorder %s344, 0
            // Predicated region
            $region150: #{_forward_impl.5} parent=137 // pred_check
              %p346 = pneg %p345
            $region151: #{_forward_impl.5} parent=137 // pred_check_branch
              %348 = sbr.rel (%p346) target = $region153
            $region152: #{_forward_impl.5} parent=137 // pred_region
              loop: start=0, step=1, limit=1
              $region154: #{_forward_impl.5} parent=152 // loop_pre_header
                _
              $region155: #{_forward_impl.5} parent=152 // loop_header
                %s350 = sphi 0, %s354
                %p351 = scmp.ge.s32.totalorder %s350, 1
                %s355 = sphi %s321, %s321
                %s356 = sphi %s322, %s322
              $region156: #{_forward_impl.5} parent=152 // loop_header_branch
                %353 = sbr.rel (%p351) target = $region160
              $region157: #{_forward_impl.5} parent=152 // loop_body
                %v357 = vld [vmem:[%s355] sm:$0xff]
                %358 = vst [vmem:[%s356] sm:$0xff] %v357
                %v359 = vld [vmem:[%s355 + $0x8] sm:$0xff]
                %360 = vst [vmem:[%s356 + $0x8] sm:$0xff] %v359
                %v361 = vld [vmem:[%s355 + $0x10] sm:$0xff]
                %362 = vst [vmem:[%s356 + $0x10] sm:$0xff] %v361
                %v363 = vld [vmem:[%s355 + $0x18] sm:$0xff]
                %364 = vst [vmem:[%s356 + $0x18] sm:$0xff] %v363
              $region158: #{_forward_impl.5} parent=152 // loop_footer
                %s354 = sadd.s32 1, %s350
              $region159: #{_forward_impl.5} parent=152 // loop_footer_branch
                %349 = sbr.rel target = $region155
              $region160: #{_forward_impl.5} parent=152 // loop_exit
                _
            $region153: #{_forward_impl.5} parent=137 // pred_fallthru
              _
            %p365 = pneg %p345
            // Predicated region
            $region161: #{_forward_impl.5} parent=137 // pred_check
              _
            $region162: #{_forward_impl.5} parent=137 // pred_check_branch
              %367 = sbr.rel (%p345) target = $region164
            $region163: #{_forward_impl.5} parent=137 // pred_region
              %s368 = sand.u32 32, 7
            $region164: #{_forward_impl.5} parent=137 // pred_fallthru
              _
          $region138: #{_forward_impl.5} parent=99 // pred_fallthru
            _
          // Predicated region
          $region139: #{_forward_impl.5} parent=99 // pred_check
            %p330 = pneg %p326
          $region140: #{_forward_impl.5} parent=99 // pred_check_branch
            %332 = sbr.rel (%p330) target = $region142
          $region141: #{_forward_impl.5} parent=99 // pred_region
            %s333 = sshllo.u32 0, 32
            loop: start=0, step=1, limit=1
            $region143: #{_forward_impl.5} parent=141 // loop_pre_header
              _
            $region144: #{_forward_impl.5} parent=141 // loop_header
              %s335 = sphi 0, %s339
              %p336 = scmp.ge.s32.totalorder %s335, 1
              %s340 = sphi %s321, %s321
              %s341 = sphi %s322, %s322
            $region145: #{_forward_impl.5} parent=141 // loop_header_branch
              %338 = sbr.rel (%p336) target = $region149
            $region146: #{_forward_impl.5} parent=141 // loop_body
              %v342 = vld [vmem:[%s340] sm:%s333]
              %343 = vst [vmem:[%s341] sm:%s333] %v342
            $region147: #{_forward_impl.5} parent=141 // loop_footer
              %s339 = sadd.s32 1, %s335
            $region148: #{_forward_impl.5} parent=141 // loop_footer_branch
              %334 = sbr.rel target = $region144
            $region149: #{_forward_impl.5} parent=141 // loop_exit
              _
          $region142: #{_forward_impl.5} parent=99 // pred_fallthru
            _
          // Predicated region
          $region165: #{_forward_impl.5} parent=99 // pred_check
            _
          $region166: #{_forward_impl.5} parent=99 // pred_check_branch
            %371 = sbr.rel (0) target = $region168
          $region167: #{_forward_impl.5} parent=99 // pred_region
            %372 = vsyncadd %s324, 512
          $region168: #{_forward_impl.5} parent=99 // pred_fallthru
            _
        $region100: #{_forward_impl.5} parent=23 // pred_fallthru
          _
        %v373 = vld [vmem:[%s250] sm:$0xff]
        %v374 = vld [vmem:[%s250 + $0x8] sm:$0xff]
        %v375 = vld [vmem:[%s250 + $0x10] sm:$0xff]
        %v376 = vld [vmem:[%s250 + $0x18] sm:$0xff]
        %v377 = vld [vmem:[%s255] sm:$0xff]
        %v378 = vld [vmem:[%s255 + $0x8] sm:$0xff]
        %v379 = vld [vmem:[%s255 + $0x10] sm:$0xff]
        %v380 = vld [vmem:[%s255 + $0x18] sm:$0xff]
        %v381 = vlaneseq
        %v382 = vand.u32 %v381, 127
        %383 = vrot.lane.b32.xlu0 %v377, 127
        %v384 = vpop.permute.xlu0 %383
        %385 = vrot.lane.b32.xlu0 %v378, 127
        %v386 = vpop.permute.xlu0 %385
        %387 = vrot.lane.b32.xlu0 %v379, 127
        %v388 = vpop.permute.xlu0 %387
        %389 = vrot.lane.b32.xlu0 %v380, 127
        %v390 = vpop.permute.xlu0 %389
        %vm391 = vcmp.eq.s32.totalorder %v382, 0
        %392 = vrot.lane.b32.xlu0 %v377, 1
        %v393 = vpop.permute.xlu0 %392
        %394 = vrot.lane.b32.xlu0 %v378, 1
        %v395 = vpop.permute.xlu0 %394
        %396 = vrot.lane.b32.xlu0 %v379, 1
        %v397 = vpop.permute.xlu0 %396
        %398 = vrot.lane.b32.xlu0 %v380, 1
        %v399 = vpop.permute.xlu0 %398
        %v400 = vsel %vm391, 1, 0
        %vm401 = vcmp.eq.s32.totalorder %v400, 1
        %v402 = vsel %vm401, %v377, %v393
        %v403 = vsel %vm401, %v378, %v395
        %v404 = vsel %vm401, %v379, %v397
        %v405 = vsel %vm401, %v380, %v399
        %v406 = vsub.f32 %v384, %v402
        %v407 = vsub.f32 %v386, %v403
        %v408 = vsub.f32 %v388, %v404
        %v409 = vsub.f32 %v390, %v405
        %v410 = vmul.f32 %v406, 0.5
        %v411 = vmul.f32 %v407, 0.5
        %v412 = vmul.f32 %v408, 0.5
        %v413 = vmul.f32 %v409, 0.5
        %v414 = vrot.slane %v377, 1
        %v415 = vrot.slane %v378, 1
        %v416 = vrot.slane %v379, 1
        %v417 = vrot.slane %v380, 1
        %v418 = vlaneseq
        %v419 = vshrl.u32 %v418, 7
        %vm420 = vcmp.lt.s32.totalorder %v419, 7
        %v421 = vsel %vm420, %v416, %v417
        %v422 = vsel %vm420, %v415, %v416
        %v423 = vsel %vm420, %v414, %v415
        %v424 = vsel %vm420, %v417, %v414
        %v425 = vrot.slane %v377, 7
        %v426 = vrot.slane %v378, 7
        %v427 = vrot.slane %v379, 7
        %v428 = vrot.slane %v380, 7
        %vm429 = vcmp.lt.s32.totalorder %v419, 1
        %v430 = vsel %vm429, %v427, %v428
        %v431 = vsel %vm429, %v426, %v427
        %v432 = vsel %vm429, %v425, %v426
        %v433 = vsel %vm429, %v428, %v425
        %v434 = vsub.f32 %v423, %v433
        %v435 = vsub.f32 %v422, %v432
        %v436 = vsub.f32 %v421, %v431
        %v437 = vsub.f32 %v424, %v430
        %v438 = vmul.f32 %v434, 0.5
        %v439 = vmul.f32 %v435, 0.5
        %v440 = vmul.f32 %v436, 0.5
        %v441 = vmul.f32 %v437, 0.5
        %v442 = vsub.f32 %v373, %v377
        %v443 = vsub.f32 %v374, %v378
        %v444 = vsub.f32 %v375, %v379
        %v445 = vsub.f32 %v376, %v380
        %vm446 = vcmp.lt.s32.totalorder %v382, 16
        %v447 = vsel %vm446, 1, 0
        %v448 = vcvt.s32.f32 %v447
        %v449 = vmul.f32 %v410, %v448
        %v450 = vmul.f32 %v411, %v448
        %v451 = vmul.f32 %v412, %v448
        %v452 = vmul.f32 %v413, %v448
        %v453 = vmul.f32 %v438, %v448
        %v454 = vmul.f32 %v439, %v448
        %v455 = vmul.f32 %v440, %v448
        %v456 = vmul.f32 %v441, %v448
        %v457 = vmul.f32 %v449, %v449
        %v458 = vmul.f32 %v450, %v450
        %v459 = vmul.f32 %v451, %v451
        %v460 = vmul.f32 %v452, %v452
        %v461 = vmul.f32 %v449, %v453
        %v462 = vmul.f32 %v450, %v454
        %v463 = vmul.f32 %v451, %v455
        %v464 = vmul.f32 %v452, %v456
        %v465 = vmul.f32 %v453, %v453
        %v466 = vmul.f32 %v454, %v454
        %v467 = vmul.f32 %v455, %v455
        %v468 = vmul.f32 %v456, %v456
        %v469 = vmul.f32 %v449, %v442
        %v470 = vmul.f32 %v450, %v443
        %v471 = vmul.f32 %v451, %v444
        %v472 = vmul.f32 %v452, %v445
        %v473 = vmul.f32 %v453, %v442
        %v474 = vmul.f32 %v454, %v443
        %v475 = vmul.f32 %v455, %v444
        %v476 = vmul.f32 %v456, %v445
        %v477 = vld [vmem:[%s130] sm:$0xff]
        %v478 = vld [vmem:[%s130 + $0x8] sm:$0xff]
        %vm479 = vcmask 261120
        %v481 = vsel %vm479, %v477, 0
        %v484 = vsel %vm479, %v478, 0
        %486 = vmatprep.subr.mxu0 %v461
        %487 = vmatpush1.msra.mxu0 %v457
        %488 = vmatprep.subr.mxu0 %v462
        %489 = vmatpush1.msra.mxu0 %v458
        %490 = vmatprep.subr.mxu0 %v463
        %491 = vmatpush1.msra.mxu0 %v459
        %492 = vmatprep.subr.mxu0 %v464
        %493 = vmatpush1.msra.mxu0 %v460
        %494 = vmatprep.subr.mxu0 0.0
        %495 = vmatpush1.msra.mxu0 0.0
        %496 = vmatprep.subr.mxu0 0.0
        %497 = vmatpush1.msra.mxu0 0.0
        %498 = vmatprep.subr.mxu0 0.0
        %499 = vmatpush1.msra.mxu0 0.0
        %500 = vmatprep.subr.mxu0 0.0
        %501 = vmatpush1.msra.mxu0 0.0
        %502 = vmatprep.subr.mxu0 0.0
        %503 = vmatpush1.msra.mxu0 0.0
        %504 = vmatprep.subr.mxu0 0.0
        %505 = vmatpush1.msra.mxu0 0.0
        %506 = vmatprep.subr.mxu0 0.0
        %507 = vmatpush1.msra.mxu0 0.0
        %508 = vmatprep.subr.mxu0 0.0
        %509 = vmatpush1.msra.mxu0 0.0
        %510 = vmatprep.subr.mxu0 0.0
        %511 = vmatpush1.msra.mxu0 0.0
        %512 = vmatprep.subr.mxu0 0.0
        %513 = vmatpush1.msra.mxu0 0.0
        %514 = vmatprep.subr.mxu0 0.0
        %515 = vmatpush1.msra.mxu0 0.0
        %516 = vmatprep.subr.mxu0 0.0
        %517 = vmatpush1.msra.mxu0 0.0
        %518 = vmatprep.subr.mxu0 0.0
        %519 = vmatpush1.msra.mxu0 0.0
        %520 = vmatprep.subr.mxu0 0.0
        %521 = vmatpush1.msra.mxu0 0.0
        %522 = vmatprep.subr.mxu0 0.0
        %523 = vmatpush1.msra.mxu0 0.0
        %524 = vmatprep.subr.mxu0 0.0
        %525 = vmatpush1.msra.mxu0 0.0
        %526 = vmatprep.subr.mxu0 0.0
        %527 = vmatpush1.msra.mxu0 0.0
        %528 = vmatprep.subr.mxu0 0.0
        %529 = vmatpush1.msra.mxu0 0.0
        %530 = vmatprep.subr.mxu0 0.0
        %531 = vmatpush1.msra.mxu0 0.0
        %532 = vmatprep.subr.mxu0 0.0
        %533 = vmatpush1.msra.mxu0 0.0
        %534 = vmatprep.subr.mxu0 0.0
        %535 = vmatpush1.msra.mxu0 0.0
        %536 = vmatprep.subr.mxu0 0.0
        %537 = vmatpush1.msra.mxu0 0.0
        %538 = vmatprep.subr.mxu0 0.0
        %539 = vmatpush1.msra.mxu0 0.0
        %540 = vmatprep.subr.mxu0 0.0
        %541 = vmatpush1.msra.mxu0 0.0
        %542 = vmatprep.subr.mxu0 0.0
        %543 = vmatpush1.msra.mxu0 0.0
        %544 = vmatprep.subr.mxu0 0.0
        %545 = vmatpush1.msra.mxu0 0.0
        %546 = vmatprep.subr.mxu0 0.0
        %547 = vmatpush1.msra.mxu0 0.0
        %548 = vmatprep.subr.mxu0 0.0
        %549 = vmatpush1.msra.mxu0 0.0
        %550 = vmatprep.mubr.f32.mxu0 0.0
        %551 = vmatmul.mubr.f32.gmra.mrb[0].mxu0 %v481
        %v552 = vpop.f32.mrb[0].mxu0
        %v553 = vadd.f32 0.0, %v552
        %v554 = vpop.f32.mrb[0].mxu0
        %v555 = vadd.f32 0.0, %v554
        %556 = vmatprep.mubr.f32.mxu0 0.0
        %557 = vmatmul.mubr.f32.gmra.mrb[0].mxu0 %v484
        %v558 = vpop.f32.mrb[0].mxu0
        %v559 = vadd.f32 0.0, %v558
        %v560 = vpop.f32.mrb[0].mxu0
        %v561 = vadd.f32 0.0, %v560
        %562 = vdwg.mxu0
        %563 = vmatprep.subr.mxu0 %v469
        %564 = vmatpush1.msra.mxu0 %v465
        %565 = vmatprep.subr.mxu0 %v470
        %566 = vmatpush1.msra.mxu0 %v466
        %567 = vmatprep.subr.mxu0 %v471
        %568 = vmatpush1.msra.mxu0 %v467
        %569 = vmatprep.subr.mxu0 %v472
        %570 = vmatpush1.msra.mxu0 %v468
        %571 = vmatprep.subr.mxu0 0.0
        %572 = vmatpush1.msra.mxu0 0.0
        %573 = vmatprep.subr.mxu0 0.0
        %574 = vmatpush1.msra.mxu0 0.0
        %575 = vmatprep.subr.mxu0 0.0
        %576 = vmatpush1.msra.mxu0 0.0
        %577 = vmatprep.subr.mxu0 0.0
        %578 = vmatpush1.msra.mxu0 0.0
        %579 = vmatprep.subr.mxu0 0.0
        %580 = vmatpush1.msra.mxu0 0.0
        %581 = vmatprep.subr.mxu0 0.0
        %582 = vmatpush1.msra.mxu0 0.0
        %583 = vmatprep.subr.mxu0 0.0
        %584 = vmatpush1.msra.mxu0 0.0
        %585 = vmatprep.subr.mxu0 0.0
        %586 = vmatpush1.msra.mxu0 0.0
        %587 = vmatprep.subr.mxu0 0.0
        %588 = vmatpush1.msra.mxu0 0.0
        %589 = vmatprep.subr.mxu0 0.0
        %590 = vmatpush1.msra.mxu0 0.0
        %591 = vmatprep.subr.mxu0 0.0
        %592 = vmatpush1.msra.mxu0 0.0
        %593 = vmatprep.subr.mxu0 0.0
        %594 = vmatpush1.msra.mxu0 0.0
        %595 = vmatprep.subr.mxu0 0.0
        %596 = vmatpush1.msra.mxu0 0.0
        %597 = vmatprep.subr.mxu0 0.0
        %598 = vmatpush1.msra.mxu0 0.0
        %599 = vmatprep.subr.mxu0 0.0
        %600 = vmatpush1.msra.mxu0 0.0
        %601 = vmatprep.subr.mxu0 0.0
        %602 = vmatpush1.msra.mxu0 0.0
        %603 = vmatprep.subr.mxu0 0.0
        %604 = vmatpush1.msra.mxu0 0.0
        %605 = vmatprep.subr.mxu0 0.0
        %606 = vmatpush1.msra.mxu0 0.0
        %607 = vmatprep.subr.mxu0 0.0
        %608 = vmatpush1.msra.mxu0 0.0
        %609 = vmatprep.subr.mxu0 0.0
        %610 = vmatpush1.msra.mxu0 0.0
        %611 = vmatprep.subr.mxu0 0.0
        %612 = vmatpush1.msra.mxu0 0.0
        %613 = vmatprep.subr.mxu0 0.0
        %614 = vmatpush1.msra.mxu0 0.0
        %615 = vmatprep.subr.mxu0 0.0
        %616 = vmatpush1.msra.mxu0 0.0
        %617 = vmatprep.subr.mxu0 0.0
        %618 = vmatpush1.msra.mxu0 0.0
        %619 = vmatprep.subr.mxu0 0.0
        %620 = vmatpush1.msra.mxu0 0.0
        %621 = vmatprep.subr.mxu0 0.0
        %622 = vmatpush1.msra.mxu0 0.0
        %623 = vmatprep.subr.mxu0 0.0
        %624 = vmatpush1.msra.mxu0 0.0
        %625 = vmatprep.subr.mxu0 0.0
        %626 = vmatpush1.msra.mxu0 0.0
        %627 = vmatprep.mubr.f32.mxu0 0.0
        %628 = vmatmul.mubr.f32.gmra.mrb[0].mxu0 %v481
        %v629 = vpop.f32.mrb[0].mxu0
        %v630 = vadd.f32 0.0, %v629
        %v631 = vpop.f32.mrb[0].mxu0
        %v632 = vadd.f32 0.0, %v631
        %633 = vmatprep.mubr.f32.mxu0 0.0
        %634 = vmatmul.mubr.f32.gmra.mrb[0].mxu0 %v484
        %v635 = vpop.f32.mrb[0].mxu0
        %v636 = vadd.f32 0.0, %v635
        %v637 = vpop.f32.mrb[0].mxu0
        %v638 = vadd.f32 0.0, %v637
        %639 = vdwg.mxu0
        %640 = vmatprep.subr.mxu0 0.0
        %641 = vmatpush1.msra.mxu0 %v473
        %642 = vmatprep.subr.mxu0 0.0
        %643 = vmatpush1.msra.mxu0 %v474
        %644 = vmatprep.subr.mxu0 0.0
        %645 = vmatpush1.msra.mxu0 %v475
        %646 = vmatprep.subr.mxu0 0.0
        %647 = vmatpush1.msra.mxu0 %v476
        %648 = vmatprep.subr.mxu0 0.0
        %649 = vmatpush1.msra.mxu0 0.0
        %650 = vmatprep.subr.mxu0 0.0
        %651 = vmatpush1.msra.mxu0 0.0
        %652 = vmatprep.subr.mxu0 0.0
        %653 = vmatpush1.msra.mxu0 0.0
        %654 = vmatprep.subr.mxu0 0.0
        %655 = vmatpush1.msra.mxu0 0.0
        %656 = vmatprep.subr.mxu0 0.0
        %657 = vmatpush1.msra.mxu0 0.0
        %658 = vmatprep.subr.mxu0 0.0
        %659 = vmatpush1.msra.mxu0 0.0
        %660 = vmatprep.subr.mxu0 0.0
        %661 = vmatpush1.msra.mxu0 0.0
        %662 = vmatprep.subr.mxu0 0.0
        %663 = vmatpush1.msra.mxu0 0.0
        %664 = vmatprep.subr.mxu0 0.0
        %665 = vmatpush1.msra.mxu0 0.0
        %666 = vmatprep.subr.mxu0 0.0
        %667 = vmatpush1.msra.mxu0 0.0
        %668 = vmatprep.subr.mxu0 0.0
        %669 = vmatpush1.msra.mxu0 0.0
        %670 = vmatprep.subr.mxu0 0.0
        %671 = vmatpush1.msra.mxu0 0.0
        %672 = vmatprep.subr.mxu0 0.0
        %673 = vmatpush1.msra.mxu0 0.0
        %674 = vmatprep.subr.mxu0 0.0
        %675 = vmatpush1.msra.mxu0 0.0
        %676 = vmatprep.subr.mxu0 0.0
        %677 = vmatpush1.msra.mxu0 0.0
        %678 = vmatprep.subr.mxu0 0.0
        %679 = vmatpush1.msra.mxu0 0.0
        %680 = vmatprep.subr.mxu0 0.0
        %681 = vmatpush1.msra.mxu0 0.0
        %682 = vmatprep.subr.mxu0 0.0
        %683 = vmatpush1.msra.mxu0 0.0
        %684 = vmatprep.subr.mxu0 0.0
        %685 = vmatpush1.msra.mxu0 0.0
        %686 = vmatprep.subr.mxu0 0.0
        %687 = vmatpush1.msra.mxu0 0.0
        %688 = vmatprep.subr.mxu0 0.0
        %689 = vmatpush1.msra.mxu0 0.0
        %690 = vmatprep.subr.mxu0 0.0
        %691 = vmatpush1.msra.mxu0 0.0
        %692 = vmatprep.subr.mxu0 0.0
        %693 = vmatpush1.msra.mxu0 0.0
        %694 = vmatprep.subr.mxu0 0.0
        %695 = vmatpush1.msra.mxu0 0.0
        %696 = vmatprep.subr.mxu0 0.0
        %697 = vmatpush1.msra.mxu0 0.0
        %698 = vmatprep.subr.mxu0 0.0
        %699 = vmatpush1.msra.mxu0 0.0
        %700 = vmatprep.subr.mxu0 0.0
        %701 = vmatpush1.msra.mxu0 0.0
        %702 = vmatprep.subr.mxu0 0.0
        %703 = vmatpush1.msra.mxu0 0.0
        %704 = vmatprep.mubr.f32.mxu0 0.0
        %705 = vmatmul.mubr.f32.gmra.mrb[0].mxu0 %v481
        %v706 = vpop.f32.mrb[0].mxu0
        %v707 = vadd.f32 0.0, %v706
        %v708 = vpop.f32.mrb[0].mxu0
        %709 = vmatprep.mubr.f32.mxu0 0.0
        %710 = vmatmul.mubr.f32.gmra.mrb[0].mxu0 %v484
        %v711 = vpop.f32.mrb[0].mxu0
        %v712 = vadd.f32 0.0, %v711
        %v713 = vpop.f32.mrb[0].mxu0
        %714 = vdwg.mxu0
        %715 = vrot.lane.b32.xlu0 %v553, 1
        %v716 = vpop.permute.xlu0 %715
        %717 = vrot.lane.b32.xlu0 %v559, 1
        %v718 = vpop.permute.xlu0 %717
        %719 = vrot.lane.b32.xlu0 %v555, 1
        %v720 = vpop.permute.xlu0 %719
        %721 = vrot.lane.b32.xlu0 %v561, 1
        %v722 = vpop.permute.xlu0 %721
        %723 = vrot.lane.b32.xlu0 %v630, 1
        %v724 = vpop.permute.xlu0 %723
        %725 = vrot.lane.b32.xlu0 %v636, 1
        %v726 = vpop.permute.xlu0 %725
        %727 = vrot.lane.b32.xlu0 %v632, 1
        %v728 = vpop.permute.xlu0 %727
        %729 = vrot.lane.b32.xlu0 %v638, 1
        %v730 = vpop.permute.xlu0 %729
        %731 = vrot.lane.b32.xlu0 %v707, 1
        %v732 = vpop.permute.xlu0 %731
        %733 = vrot.lane.b32.xlu0 %v712, 1
        %v734 = vpop.permute.xlu0 %733
        %vm735 = vcmp.lt.s32.totalorder %v382, 1
        %v736 = vsel %vm735, %v728, %v732
        %v737 = vsel %vm735, %v730, %v734
        %v738 = vsel %vm735, %v724, %v728
        %v739 = vsel %vm735, %v726, %v730
        %v740 = vsel %vm735, %v720, %v724
        %v741 = vsel %vm735, %v722, %v726
        %v742 = vsel %vm735, %v716, %v720
        %v743 = vsel %vm735, %v718, %v722
        %v744 = vsel %vm735, %v732, %v716
        %v745 = vsel %vm735, %v734, %v718
        %v746 = vadd.f32 %v553, %v744
        %v747 = vadd.f32 %v555, %v742
        %v748 = vadd.f32 %v630, %v740
        %v749 = vadd.f32 %v632, %v738
        %v750 = vadd.f32 %v707, %v736
        %v751 = vadd.f32 %v559, %v745
        %v752 = vadd.f32 %v561, %v743
        %v753 = vadd.f32 %v636, %v741
        %v754 = vadd.f32 %v638, %v739
        %v755 = vadd.f32 %v712, %v737
        %756 = vrot.lane.b32.xlu0 %v553, 127
        %v757 = vpop.permute.xlu0 %756
        %758 = vrot.lane.b32.xlu0 %v559, 127
        %v759 = vpop.permute.xlu0 %758
        %760 = vrot.lane.b32.xlu0 %v555, 127
        %v761 = vpop.permute.xlu0 %760
        %762 = vrot.lane.b32.xlu0 %v561, 127
        %v763 = vpop.permute.xlu0 %762
        %764 = vrot.lane.b32.xlu0 %v630, 127
        %v765 = vpop.permute.xlu0 %764
        %766 = vrot.lane.b32.xlu0 %v636, 127
        %v767 = vpop.permute.xlu0 %766
        %768 = vrot.lane.b32.xlu0 %v632, 127
        %v769 = vpop.permute.xlu0 %768
        %770 = vrot.lane.b32.xlu0 %v638, 127
        %v771 = vpop.permute.xlu0 %770
        %772 = vrot.lane.b32.xlu0 %v707, 127
        %v773 = vpop.permute.xlu0 %772
        %774 = vrot.lane.b32.xlu0 %v712, 127
        %v775 = vpop.permute.xlu0 %774
        %vm776 = vcmp.lt.s32.totalorder %v382, 127
        %v777 = vsel %vm776, %v769, %v773
        %v778 = vsel %vm776, %v771, %v775
        %v779 = vsel %vm776, %v765, %v769
        %v780 = vsel %vm776, %v767, %v771
        %v781 = vsel %vm776, %v761, %v765
        %v782 = vsel %vm776, %v763, %v767
        %v783 = vsel %vm776, %v757, %v761
        %v784 = vsel %vm776, %v759, %v763
        %v785 = vsel %vm776, %v773, %v757
        %v786 = vsel %vm776, %v775, %v759
        %v787 = vadd.f32 %v746, %v783
        %v788 = vadd.f32 %v747, %v781
        %v789 = vadd.f32 %v748, %v779
        %v790 = vadd.f32 %v749, %v777
        %v791 = vadd.f32 %v750, %v785
        %v792 = vadd.f32 %v751, %v784
        %v793 = vadd.f32 %v752, %v782
        %v794 = vadd.f32 %v753, %v780
        %v795 = vadd.f32 %v754, %v778
        %v796 = vadd.f32 %v755, %v786
        %797 = vrot.lane.b32.xlu0 %v553, 2
        %v798 = vpop.permute.xlu0 %797
        %799 = vrot.lane.b32.xlu0 %v559, 2
        %v800 = vpop.permute.xlu0 %799
        %801 = vrot.lane.b32.xlu0 %v555, 2
        %v802 = vpop.permute.xlu0 %801
        %803 = vrot.lane.b32.xlu0 %v561, 2
        %v804 = vpop.permute.xlu0 %803
        %805 = vrot.lane.b32.xlu0 %v630, 2
        %v806 = vpop.permute.xlu0 %805
        %807 = vrot.lane.b32.xlu0 %v636, 2
        %v808 = vpop.permute.xlu0 %807
        %809 = vrot.lane.b32.xlu0 %v632, 2
        %v810 = vpop.permute.xlu0 %809
        %811 = vrot.lane.b32.xlu0 %v638, 2
        %v812 = vpop.permute.xlu0 %811
        %813 = vrot.lane.b32.xlu0 %v707, 2
        %v814 = vpop.permute.xlu0 %813
        %815 = vrot.lane.b32.xlu0 %v712, 2
        %v816 = vpop.permute.xlu0 %815
        %vm817 = vcmp.lt.s32.totalorder %v382, 2
        %v818 = vsel %vm817, %v810, %v814
        %v819 = vsel %vm817, %v812, %v816
        %v820 = vsel %vm817, %v806, %v810
        %v821 = vsel %vm817, %v808, %v812
        %v822 = vsel %vm817, %v802, %v806
        %v823 = vsel %vm817, %v804, %v808
        %v824 = vsel %vm817, %v798, %v802
        %v825 = vsel %vm817, %v800, %v804
        %v826 = vsel %vm817, %v814, %v798
        %v827 = vsel %vm817, %v816, %v800
        %v828 = vadd.f32 %v787, %v826
        %v829 = vadd.f32 %v788, %v824
        %v830 = vadd.f32 %v789, %v822
        %v831 = vadd.f32 %v790, %v820
        %v832 = vadd.f32 %v791, %v818
        %v833 = vadd.f32 %v792, %v827
        %v834 = vadd.f32 %v793, %v825
        %v835 = vadd.f32 %v794, %v823
        %v836 = vadd.f32 %v795, %v821
        %v837 = vadd.f32 %v796, %v819
        %838 = vrot.lane.b32.xlu0 %v553, 126
        %v839 = vpop.permute.xlu0 %838
        %840 = vrot.lane.b32.xlu0 %v559, 126
        %v841 = vpop.permute.xlu0 %840
        %842 = vrot.lane.b32.xlu0 %v555, 126
        %v843 = vpop.permute.xlu0 %842
        %844 = vrot.lane.b32.xlu0 %v561, 126
        %v845 = vpop.permute.xlu0 %844
        %846 = vrot.lane.b32.xlu0 %v630, 126
        %v847 = vpop.permute.xlu0 %846
        %848 = vrot.lane.b32.xlu0 %v636, 126
        %v849 = vpop.permute.xlu0 %848
        %850 = vrot.lane.b32.xlu0 %v632, 126
        %v851 = vpop.permute.xlu0 %850
        %852 = vrot.lane.b32.xlu0 %v638, 126
        %v853 = vpop.permute.xlu0 %852
        %854 = vrot.lane.b32.xlu0 %v707, 126
        %v855 = vpop.permute.xlu0 %854
        %856 = vrot.lane.b32.xlu0 %v712, 126
        %v857 = vpop.permute.xlu0 %856
        %vm858 = vcmp.lt.s32.totalorder %v382, 126
        %v859 = vsel %vm858, %v851, %v855
        %v860 = vsel %vm858, %v853, %v857
        %v861 = vsel %vm858, %v847, %v851
        %v862 = vsel %vm858, %v849, %v853
        %v863 = vsel %vm858, %v843, %v847
        %v864 = vsel %vm858, %v845, %v849
        %v865 = vsel %vm858, %v839, %v843
        %v866 = vsel %vm858, %v841, %v845
        %v867 = vsel %vm858, %v855, %v839
        %v868 = vsel %vm858, %v857, %v841
        %v869 = vadd.f32 %v828, %v865
        %v870 = vadd.f32 %v829, %v863
        %v871 = vadd.f32 %v830, %v861
        %v872 = vadd.f32 %v831, %v859
        %v873 = vadd.f32 %v832, %v867
        %v874 = vadd.f32 %v833, %v866
        %v875 = vadd.f32 %v834, %v864
        %v876 = vadd.f32 %v835, %v862
        %v877 = vadd.f32 %v836, %v860
        %v878 = vadd.f32 %v837, %v868
        %879 = vrot.lane.b32.xlu0 %v553, 3
        %v880 = vpop.permute.xlu0 %879
        %881 = vrot.lane.b32.xlu0 %v559, 3
        %v882 = vpop.permute.xlu0 %881
        %883 = vrot.lane.b32.xlu0 %v555, 3
        %v884 = vpop.permute.xlu0 %883
        %885 = vrot.lane.b32.xlu0 %v561, 3
        %v886 = vpop.permute.xlu0 %885
        %887 = vrot.lane.b32.xlu0 %v630, 3
        %v888 = vpop.permute.xlu0 %887
        %889 = vrot.lane.b32.xlu0 %v636, 3
        %v890 = vpop.permute.xlu0 %889
        %891 = vrot.lane.b32.xlu0 %v632, 3
        %v892 = vpop.permute.xlu0 %891
        %893 = vrot.lane.b32.xlu0 %v638, 3
        %v894 = vpop.permute.xlu0 %893
        %895 = vrot.lane.b32.xlu0 %v707, 3
        %v896 = vpop.permute.xlu0 %895
        %897 = vrot.lane.b32.xlu0 %v712, 3
        %v898 = vpop.permute.xlu0 %897
        %vm899 = vcmp.lt.s32.totalorder %v382, 3
        %v900 = vsel %vm899, %v892, %v896
        %v901 = vsel %vm899, %v894, %v898
        %v902 = vsel %vm899, %v888, %v892
        %v903 = vsel %vm899, %v890, %v894
        %v904 = vsel %vm899, %v884, %v888
        %v905 = vsel %vm899, %v886, %v890
        %v906 = vsel %vm899, %v880, %v884
        %v907 = vsel %vm899, %v882, %v886
        %v908 = vsel %vm899, %v896, %v880
        %v909 = vsel %vm899, %v898, %v882
        %v910 = vadd.f32 %v869, %v908
        %v911 = vadd.f32 %v870, %v906
        %v912 = vadd.f32 %v871, %v904
        %v913 = vadd.f32 %v872, %v902
        %v914 = vadd.f32 %v873, %v900
        %v915 = vadd.f32 %v874, %v909
        %v916 = vadd.f32 %v875, %v907
        %v917 = vadd.f32 %v876, %v905
        %v918 = vadd.f32 %v877, %v903
        %v919 = vadd.f32 %v878, %v901
        %920 = vrot.lane.b32.xlu0 %v553, 125
        %v921 = vpop.permute.xlu0 %920
        %922 = vrot.lane.b32.xlu0 %v559, 125
        %v923 = vpop.permute.xlu0 %922
        %924 = vrot.lane.b32.xlu0 %v555, 125
        %v925 = vpop.permute.xlu0 %924
        %926 = vrot.lane.b32.xlu0 %v561, 125
        %v927 = vpop.permute.xlu0 %926
        %928 = vrot.lane.b32.xlu0 %v630, 125
        %v929 = vpop.permute.xlu0 %928
        %930 = vrot.lane.b32.xlu0 %v636, 125
        %v931 = vpop.permute.xlu0 %930
        %932 = vrot.lane.b32.xlu0 %v632, 125
        %v933 = vpop.permute.xlu0 %932
        %934 = vrot.lane.b32.xlu0 %v638, 125
        %v935 = vpop.permute.xlu0 %934
        %936 = vrot.lane.b32.xlu0 %v707, 125
        %v937 = vpop.permute.xlu0 %936
        %938 = vrot.lane.b32.xlu0 %v712, 125
        %v939 = vpop.permute.xlu0 %938
        %vm940 = vcmp.lt.s32.totalorder %v382, 125
        %v941 = vsel %vm940, %v933, %v937
        %v942 = vsel %vm940, %v935, %v939
        %v943 = vsel %vm940, %v929, %v933
        %v944 = vsel %vm940, %v931, %v935
        %v945 = vsel %vm940, %v925, %v929
        %v946 = vsel %vm940, %v927, %v931
        %v947 = vsel %vm940, %v921, %v925
        %v948 = vsel %vm940, %v923, %v927
        %v949 = vsel %vm940, %v937, %v921
        %v950 = vsel %vm940, %v939, %v923
        %v951 = vadd.f32 %v910, %v947
        %v952 = vadd.f32 %v911, %v945
        %v953 = vadd.f32 %v912, %v943
        %v954 = vadd.f32 %v913, %v941
        %v955 = vadd.f32 %v914, %v949
        %v956 = vadd.f32 %v915, %v948
        %v957 = vadd.f32 %v916, %v946
        %v958 = vadd.f32 %v917, %v944
        %v959 = vadd.f32 %v918, %v942
        %v960 = vadd.f32 %v919, %v950
        %961 = vrot.lane.b32.xlu0 %v553, 4
        %v962 = vpop.permute.xlu0 %961
        %963 = vrot.lane.b32.xlu0 %v559, 4
        %v964 = vpop.permute.xlu0 %963
        %965 = vrot.lane.b32.xlu0 %v555, 4
        %v966 = vpop.permute.xlu0 %965
        %967 = vrot.lane.b32.xlu0 %v561, 4
        %v968 = vpop.permute.xlu0 %967
        %969 = vrot.lane.b32.xlu0 %v630, 4
        %v970 = vpop.permute.xlu0 %969
        %971 = vrot.lane.b32.xlu0 %v636, 4
        %v972 = vpop.permute.xlu0 %971
        %973 = vrot.lane.b32.xlu0 %v632, 4
        %v974 = vpop.permute.xlu0 %973
        %975 = vrot.lane.b32.xlu0 %v638, 4
        %v976 = vpop.permute.xlu0 %975
        %977 = vrot.lane.b32.xlu0 %v707, 4
        %v978 = vpop.permute.xlu0 %977
        %979 = vrot.lane.b32.xlu0 %v712, 4
        %v980 = vpop.permute.xlu0 %979
        %vm981 = vcmp.lt.s32.totalorder %v382, 4
        %v982 = vsel %vm981, %v974, %v978
        %v983 = vsel %vm981, %v976, %v980
        %v984 = vsel %vm981, %v970, %v974
        %v985 = vsel %vm981, %v972, %v976
        %v986 = vsel %vm981, %v966, %v970
        %v987 = vsel %vm981, %v968, %v972
        %v988 = vsel %vm981, %v962, %v966
        %v989 = vsel %vm981, %v964, %v968
        %v990 = vsel %vm981, %v978, %v962
        %v991 = vsel %vm981, %v980, %v964
        %v992 = vadd.f32 %v951, %v990
        %v993 = vadd.f32 %v952, %v988
        %v994 = vadd.f32 %v953, %v986
        %v995 = vadd.f32 %v954, %v984
        %v996 = vadd.f32 %v955, %v982
        %v997 = vadd.f32 %v956, %v991
        %v998 = vadd.f32 %v957, %v989
        %v999 = vadd.f32 %v958, %v987
        %v1000 = vadd.f32 %v959, %v985
        %v1001 = vadd.f32 %v960, %v983
        %1002 = vrot.lane.b32.xlu0 %v553, 124
        %v1003 = vpop.permute.xlu0 %1002
        %1004 = vrot.lane.b32.xlu0 %v559, 124
        %v1005 = vpop.permute.xlu0 %1004
        %1006 = vrot.lane.b32.xlu0 %v555, 124
        %v1007 = vpop.permute.xlu0 %1006
        %1008 = vrot.lane.b32.xlu0 %v561, 124
        %v1009 = vpop.permute.xlu0 %1008
        %1010 = vrot.lane.b32.xlu0 %v630, 124
        %v1011 = vpop.permute.xlu0 %1010
        %1012 = vrot.lane.b32.xlu0 %v636, 124
        %v1013 = vpop.permute.xlu0 %1012
        %1014 = vrot.lane.b32.xlu0 %v632, 124
        %v1015 = vpop.permute.xlu0 %1014
        %1016 = vrot.lane.b32.xlu0 %v638, 124
        %v1017 = vpop.permute.xlu0 %1016
        %1018 = vrot.lane.b32.xlu0 %v707, 124
        %v1019 = vpop.permute.xlu0 %1018
        %1020 = vrot.lane.b32.xlu0 %v712, 124
        %v1021 = vpop.permute.xlu0 %1020
        %vm1022 = vcmp.lt.s32.totalorder %v382, 124
        %v1023 = vsel %vm1022, %v1015, %v1019
        %v1024 = vsel %vm1022, %v1017, %v1021
        %v1025 = vsel %vm1022, %v1011, %v1015
        %v1026 = vsel %vm1022, %v1013, %v1017
        %v1027 = vsel %vm1022, %v1007, %v1011
        %v1028 = vsel %vm1022, %v1009, %v1013
        %v1029 = vsel %vm1022, %v1003, %v1007
        %v1030 = vsel %vm1022, %v1005, %v1009
        %v1031 = vsel %vm1022, %v1019, %v1003
        %v1032 = vsel %vm1022, %v1021, %v1005
        %v1033 = vadd.f32 %v992, %v1029
        %v1034 = vadd.f32 %v993, %v1027
        %v1035 = vadd.f32 %v994, %v1025
        %v1036 = vadd.f32 %v995, %v1023
        %v1037 = vadd.f32 %v996, %v1031
        %v1038 = vadd.f32 %v997, %v1030
        %v1039 = vadd.f32 %v998, %v1028
        %v1040 = vadd.f32 %v999, %v1026
        %v1041 = vadd.f32 %v1000, %v1024
        %v1042 = vadd.f32 %v1001, %v1032
        %1043 = vrot.lane.b32.xlu0 %v553, 5
        %v1044 = vpop.permute.xlu0 %1043
        %1045 = vrot.lane.b32.xlu0 %v559, 5
        %v1046 = vpop.permute.xlu0 %1045
        %1047 = vrot.lane.b32.xlu0 %v555, 5
        %v1048 = vpop.permute.xlu0 %1047
        %1049 = vrot.lane.b32.xlu0 %v561, 5
        %v1050 = vpop.permute.xlu0 %1049
        %1051 = vrot.lane.b32.xlu0 %v630, 5
        %v1052 = vpop.permute.xlu0 %1051
        %1053 = vrot.lane.b32.xlu0 %v636, 5
        %v1054 = vpop.permute.xlu0 %1053
        %1055 = vrot.lane.b32.xlu0 %v632, 5
        %v1056 = vpop.permute.xlu0 %1055
        %1057 = vrot.lane.b32.xlu0 %v638, 5
        %v1058 = vpop.permute.xlu0 %1057
        %1059 = vrot.lane.b32.xlu0 %v707, 5
        %v1060 = vpop.permute.xlu0 %1059
        %1061 = vrot.lane.b32.xlu0 %v712, 5
        %v1062 = vpop.permute.xlu0 %1061
        %vm1063 = vcmp.lt.s32.totalorder %v382, 5
        %v1064 = vsel %vm1063, %v1056, %v1060
        %v1065 = vsel %vm1063, %v1058, %v1062
        %v1066 = vsel %vm1063, %v1052, %v1056
        %v1067 = vsel %vm1063, %v1054, %v1058
        %v1068 = vsel %vm1063, %v1048, %v1052
        %v1069 = vsel %vm1063, %v1050, %v1054
        %v1070 = vsel %vm1063, %v1044, %v1048
        %v1071 = vsel %vm1063, %v1046, %v1050
        %v1072 = vsel %vm1063, %v1060, %v1044
        %v1073 = vsel %vm1063, %v1062, %v1046
        %v1074 = vadd.f32 %v1033, %v1072
        %v1075 = vadd.f32 %v1034, %v1070
        %v1076 = vadd.f32 %v1035, %v1068
        %v1077 = vadd.f32 %v1036, %v1066
        %v1078 = vadd.f32 %v1037, %v1064
        %v1079 = vadd.f32 %v1038, %v1073
        %v1080 = vadd.f32 %v1039, %v1071
        %v1081 = vadd.f32 %v1040, %v1069
        %v1082 = vadd.f32 %v1041, %v1067
        %v1083 = vadd.f32 %v1042, %v1065
        %1084 = vrot.lane.b32.xlu0 %v553, 123
        %v1085 = vpop.permute.xlu0 %1084
        %1086 = vrot.lane.b32.xlu0 %v559, 123
        %v1087 = vpop.permute.xlu0 %1086
        %1088 = vrot.lane.b32.xlu0 %v555, 123
        %v1089 = vpop.permute.xlu0 %1088
        %1090 = vrot.lane.b32.xlu0 %v561, 123
        %v1091 = vpop.permute.xlu0 %1090
        %1092 = vrot.lane.b32.xlu0 %v630, 123
        %v1093 = vpop.permute.xlu0 %1092
        %1094 = vrot.lane.b32.xlu0 %v636, 123
        %v1095 = vpop.permute.xlu0 %1094
        %1096 = vrot.lane.b32.xlu0 %v632, 123
        %v1097 = vpop.permute.xlu0 %1096
        %1098 = vrot.lane.b32.xlu0 %v638, 123
        %v1099 = vpop.permute.xlu0 %1098
        %1100 = vrot.lane.b32.xlu0 %v707, 123
        %v1101 = vpop.permute.xlu0 %1100
        %1102 = vrot.lane.b32.xlu0 %v712, 123
        %v1103 = vpop.permute.xlu0 %1102
        %vm1104 = vcmp.lt.s32.totalorder %v382, 123
        %v1105 = vsel %vm1104, %v1097, %v1101
        %v1106 = vsel %vm1104, %v1099, %v1103
        %v1107 = vsel %vm1104, %v1093, %v1097
        %v1108 = vsel %vm1104, %v1095, %v1099
        %v1109 = vsel %vm1104, %v1089, %v1093
        %v1110 = vsel %vm1104, %v1091, %v1095
        %v1111 = vsel %vm1104, %v1085, %v1089
        %v1112 = vsel %vm1104, %v1087, %v1091
        %v1113 = vsel %vm1104, %v1101, %v1085
        %v1114 = vsel %vm1104, %v1103, %v1087
        %v1115 = vadd.f32 %v1074, %v1111
        %v1116 = vadd.f32 %v1075, %v1109
        %v1117 = vadd.f32 %v1076, %v1107
        %v1118 = vadd.f32 %v1077, %v1105
        %v1119 = vadd.f32 %v1078, %v1113
        %v1120 = vadd.f32 %v1079, %v1112
        %v1121 = vadd.f32 %v1080, %v1110
        %v1122 = vadd.f32 %v1081, %v1108
        %v1123 = vadd.f32 %v1082, %v1106
        %v1124 = vadd.f32 %v1083, %v1114
        %1125 = vrot.lane.b32.xlu0 %v553, 6
        %v1126 = vpop.permute.xlu0 %1125
        %1127 = vrot.lane.b32.xlu0 %v559, 6
        %v1128 = vpop.permute.xlu0 %1127
        %1129 = vrot.lane.b32.xlu0 %v555, 6
        %v1130 = vpop.permute.xlu0 %1129
        %1131 = vrot.lane.b32.xlu0 %v561, 6
        %v1132 = vpop.permute.xlu0 %1131
        %1133 = vrot.lane.b32.xlu0 %v630, 6
        %v1134 = vpop.permute.xlu0 %1133
        %1135 = vrot.lane.b32.xlu0 %v636, 6
        %v1136 = vpop.permute.xlu0 %1135
        %1137 = vrot.lane.b32.xlu0 %v632, 6
        %v1138 = vpop.permute.xlu0 %1137
        %1139 = vrot.lane.b32.xlu0 %v638, 6
        %v1140 = vpop.permute.xlu0 %1139
        %1141 = vrot.lane.b32.xlu0 %v707, 6
        %v1142 = vpop.permute.xlu0 %1141
        %1143 = vrot.lane.b32.xlu0 %v712, 6
        %v1144 = vpop.permute.xlu0 %1143
        %vm1145 = vcmp.lt.s32.totalorder %v382, 6
        %v1146 = vsel %vm1145, %v1138, %v1142
        %v1147 = vsel %vm1145, %v1140, %v1144
        %v1148 = vsel %vm1145, %v1134, %v1138
        %v1149 = vsel %vm1145, %v1136, %v1140
        %v1150 = vsel %vm1145, %v1130, %v1134
        %v1151 = vsel %vm1145, %v1132, %v1136
        %v1152 = vsel %vm1145, %v1126, %v1130
        %v1153 = vsel %vm1145, %v1128, %v1132
        %v1154 = vsel %vm1145, %v1142, %v1126
        %v1155 = vsel %vm1145, %v1144, %v1128
        %v1156 = vadd.f32 %v1115, %v1154
        %v1157 = vadd.f32 %v1116, %v1152
        %v1158 = vadd.f32 %v1117, %v1150
        %v1159 = vadd.f32 %v1118, %v1148
        %v1160 = vadd.f32 %v1119, %v1146
        %v1161 = vadd.f32 %v1120, %v1155
        %v1162 = vadd.f32 %v1121, %v1153
        %v1163 = vadd.f32 %v1122, %v1151
        %v1164 = vadd.f32 %v1123, %v1149
        %v1165 = vadd.f32 %v1124, %v1147
        %1166 = vrot.lane.b32.xlu0 %v553, 122
        %v1167 = vpop.permute.xlu0 %1166
        %1168 = vrot.lane.b32.xlu0 %v559, 122
        %v1169 = vpop.permute.xlu0 %1168
        %1170 = vrot.lane.b32.xlu0 %v555, 122
        %v1171 = vpop.permute.xlu0 %1170
        %1172 = vrot.lane.b32.xlu0 %v561, 122
        %v1173 = vpop.permute.xlu0 %1172
        %1174 = vrot.lane.b32.xlu0 %v630, 122
        %v1175 = vpop.permute.xlu0 %1174
        %1176 = vrot.lane.b32.xlu0 %v636, 122
        %v1177 = vpop.permute.xlu0 %1176
        %1178 = vrot.lane.b32.xlu0 %v632, 122
        %v1179 = vpop.permute.xlu0 %1178
        %1180 = vrot.lane.b32.xlu0 %v638, 122
        %v1181 = vpop.permute.xlu0 %1180
        %1182 = vrot.lane.b32.xlu0 %v707, 122
        %v1183 = vpop.permute.xlu0 %1182
        %1184 = vrot.lane.b32.xlu0 %v712, 122
        %v1185 = vpop.permute.xlu0 %1184
        %vm1186 = vcmp.lt.s32.totalorder %v382, 122
        %v1187 = vsel %vm1186, %v1179, %v1183
        %v1188 = vsel %vm1186, %v1181, %v1185
        %v1189 = vsel %vm1186, %v1175, %v1179
        %v1190 = vsel %vm1186, %v1177, %v1181
        %v1191 = vsel %vm1186, %v1171, %v1175
        %v1192 = vsel %vm1186, %v1173, %v1177
        %v1193 = vsel %vm1186, %v1167, %v1171
        %v1194 = vsel %vm1186, %v1169, %v1173
        %v1195 = vsel %vm1186, %v1183, %v1167
        %v1196 = vsel %vm1186, %v1185, %v1169
        %v1197 = vadd.f32 %v1156, %v1193
        %v1198 = vadd.f32 %v1157, %v1191
        %v1199 = vadd.f32 %v1158, %v1189
        %v1200 = vadd.f32 %v1159, %v1187
        %v1201 = vadd.f32 %v1160, %v1195
        %v1202 = vadd.f32 %v1161, %v1194
        %v1203 = vadd.f32 %v1162, %v1192
        %v1204 = vadd.f32 %v1163, %v1190
        %v1205 = vadd.f32 %v1164, %v1188
        %v1206 = vadd.f32 %v1165, %v1196
        %1207 = vrot.lane.b32.xlu0 %v553, 7
        %v1208 = vpop.permute.xlu0 %1207
        %1209 = vrot.lane.b32.xlu0 %v559, 7
        %v1210 = vpop.permute.xlu0 %1209
        %1211 = vrot.lane.b32.xlu0 %v555, 7
        %v1212 = vpop.permute.xlu0 %1211
        %1213 = vrot.lane.b32.xlu0 %v561, 7
        %v1214 = vpop.permute.xlu0 %1213
        %1215 = vrot.lane.b32.xlu0 %v630, 7
        %v1216 = vpop.permute.xlu0 %1215
        %1217 = vrot.lane.b32.xlu0 %v636, 7
        %v1218 = vpop.permute.xlu0 %1217
        %1219 = vrot.lane.b32.xlu0 %v632, 7
        %v1220 = vpop.permute.xlu0 %1219
        %1221 = vrot.lane.b32.xlu0 %v638, 7
        %v1222 = vpop.permute.xlu0 %1221
        %1223 = vrot.lane.b32.xlu0 %v707, 7
        %v1224 = vpop.permute.xlu0 %1223
        %1225 = vrot.lane.b32.xlu0 %v712, 7
        %v1226 = vpop.permute.xlu0 %1225
        %vm1227 = vcmp.lt.s32.totalorder %v382, 7
        %v1228 = vsel %vm1227, %v1220, %v1224
        %v1229 = vsel %vm1227, %v1222, %v1226
        %v1230 = vsel %vm1227, %v1216, %v1220
        %v1231 = vsel %vm1227, %v1218, %v1222
        %v1232 = vsel %vm1227, %v1212, %v1216
        %v1233 = vsel %vm1227, %v1214, %v1218
        %v1234 = vsel %vm1227, %v1208, %v1212
        %v1235 = vsel %vm1227, %v1210, %v1214
        %v1236 = vsel %vm1227, %v1224, %v1208
        %v1237 = vsel %vm1227, %v1226, %v1210
        %v1238 = vadd.f32 %v1197, %v1236
        %v1239 = vadd.f32 %v1198, %v1234
        %v1240 = vadd.f32 %v1199, %v1232
        %v1241 = vadd.f32 %v1200, %v1230
        %v1242 = vadd.f32 %v1201, %v1228
        %v1243 = vadd.f32 %v1202, %v1237
        %v1244 = vadd.f32 %v1203, %v1235
        %v1245 = vadd.f32 %v1204, %v1233
        %v1246 = vadd.f32 %v1205, %v1231
        %v1247 = vadd.f32 %v1206, %v1229
        %1248 = vrot.lane.b32.xlu0 %v553, 121
        %v1249 = vpop.permute.xlu0 %1248
        %1250 = vrot.lane.b32.xlu0 %v559, 121
        %v1251 = vpop.permute.xlu0 %1250
        %1252 = vrot.lane.b32.xlu0 %v555, 121
        %v1253 = vpop.permute.xlu0 %1252
        %1254 = vrot.lane.b32.xlu0 %v561, 121
        %v1255 = vpop.permute.xlu0 %1254
        %1256 = vrot.lane.b32.xlu0 %v630, 121
        %v1257 = vpop.permute.xlu0 %1256
        %1258 = vrot.lane.b32.xlu0 %v636, 121
        %v1259 = vpop.permute.xlu0 %1258
        %1260 = vrot.lane.b32.xlu0 %v632, 121
        %v1261 = vpop.permute.xlu0 %1260
        %1262 = vrot.lane.b32.xlu0 %v638, 121
        %v1263 = vpop.permute.xlu0 %1262
        %1264 = vrot.lane.b32.xlu0 %v707, 121
        %v1265 = vpop.permute.xlu0 %1264
        %1266 = vrot.lane.b32.xlu0 %v712, 121
        %v1267 = vpop.permute.xlu0 %1266
        %vm1268 = vcmp.lt.s32.totalorder %v382, 121
        %v1269 = vsel %vm1268, %v1261, %v1265
        %v1270 = vsel %vm1268, %v1263, %v1267
        %v1271 = vsel %vm1268, %v1257, %v1261
        %v1272 = vsel %vm1268, %v1259, %v1263
        %v1273 = vsel %vm1268, %v1253, %v1257
        %v1274 = vsel %vm1268, %v1255, %v1259
        %v1275 = vsel %vm1268, %v1249, %v1253
        %v1276 = vsel %vm1268, %v1251, %v1255
        %v1277 = vsel %vm1268, %v1265, %v1249
        %v1278 = vsel %vm1268, %v1267, %v1251
        %v1279 = vadd.f32 %v1238, %v1275
        %v1280 = vadd.f32 %v1239, %v1273
        %v1281 = vadd.f32 %v1240, %v1271
        %v1282 = vadd.f32 %v1241, %v1269
        %v1283 = vadd.f32 %v1242, %v1277
        %v1284 = vadd.f32 %v1243, %v1276
        %v1285 = vadd.f32 %v1244, %v1274
        %v1286 = vadd.f32 %v1245, %v1272
        %v1287 = vadd.f32 %v1246, %v1270
        %v1288 = vadd.f32 %v1247, %v1278
        %v1289 = vmul.f32 %v1279, %v1281
        %v1290 = vmul.f32 %v1284, %v1286
        %v1291 = vmul.f32 %v1280, %v1280
        %v1292 = vmul.f32 %v1285, %v1285
        %v1293 = vsub.f32 %v1289, %v1291
        %v1294 = vsub.f32 %v1290, %v1292
        %v1295 = vand.u32 2147483647, %v1293
        %v1296 = vand.u32 2147483647, %v1294
        %vm1297 = vcmp.gt.f32.partialorder %v1295, 1e-06
        %vm1298 = vcmp.gt.f32.partialorder %v1296, 1e-06
        %v1299 = vsel %vm1297, %v1293, 1.0
        %v1300 = vsel %vm1298, %v1294, 1.0
        %v1301 = vrcp.pop %v1299
        %v1302 = vrcp.pop %v1300
        %v1303 = vsel %vm1297, %v1301, 0.0
        %v1304 = vsel %vm1298, %v1302, 0.0
        %v1305 = vsub.f32 0.0, %v1281
        %v1306 = vsub.f32 0.0, %v1286
        %v1307 = vmul.f32 %v1305, %v1282
        %v1308 = vmul.f32 %v1306, %v1287
        %v1309 = vmul.f32 %v1280, %v1283
        %v1310 = vmul.f32 %v1285, %v1288
        %v1311 = vadd.f32 %v1307, %v1309
        %v1312 = vadd.f32 %v1308, %v1310
        %v1313 = vmul.f32 %v1311, %v1303
        %v1314 = vmul.f32 %v1312, %v1304
        %1315 = vst [vmem:[%s125] sm:$0xff] %v1313
        %1316 = vst [vmem:[%s125 + $0x8] sm:$0xff] %v1314
        %v1317 = vmul.f32 %v1280, %v1282
        %v1318 = vmul.f32 %v1285, %v1287
        %v1319 = vmul.f32 %v1279, %v1283
        %v1320 = vmul.f32 %v1284, %v1288
        %v1321 = vsub.f32 %v1317, %v1319
        %v1322 = vsub.f32 %v1318, %v1320
        %v1323 = vmul.f32 %v1321, %v1303
        %v1324 = vmul.f32 %v1322, %v1304
        %s1325 = scalar_lea.vmem %s125, 16 [#allocation5]
        %1326 = vst [vmem:[%s1325] sm:$0xff] %v1323
        %1327 = vst [vmem:[%s1325 + $0x8] sm:$0xff] %v1324
        %s1328 = sand.u32 %s65, 1
        %s1329 = scalar_lea.sflag [#allocation6], %s1328
        %s1330 = sand.u32 %s65, 1
        %s1331 = smul.addr %s1330, 32
        %s1332 = scalar_lea.vmem [#allocation5], %s1331
        // Predicated region
        $region169: #{_forward_impl.5} parent=23 // pred_check
          %p1333 = pneg %p75
        $region170: #{_forward_impl.5} parent=23 // pred_check_branch
          %1335 = sbr.rel (%p1333) target = $region172
        $region171: #{_forward_impl.5} parent=23 // pred_region
          %s1336 = smul.u32 2, %s22
          %s1338 = ssub.s32 512, 512
          %1339 = vsyncadd %s1329, %s1338
          %s1340 = smul.addr %s21, 4
          %s1341 = sadd.s32 %s1336, %s1340
          %s1342 = smul.addr %s1341, 128
          %s1343 = scalar_lea.hbm %s3, %s1342
          %s1344 = sshll.u32 %s1332, 4
          %s1345 = int_to_ptr.vmem [resolvable:$true] %s1344
          %1350 = dma.vmem_to_hbm [thread:$0]  %s1345, 512, %s1343, %s1329, 128, 128, 8
        $region172: #{_forward_impl.5} parent=23 // pred_fallthru
          _
      $region24: #{_forward_impl.5} parent=5 // pred_fallthru
        _
      %p1351 = scmp.le.s32.totalorder 2, %s12
      // Predicated region
      $region173: #{_forward_impl.5} parent=5 // pred_check
        %p1352 = pneg %p1351
      $region174: #{_forward_impl.5} parent=5 // pred_check_branch
        %1354 = sbr.rel (%p1352) target = $region176
      $region175: #{_forward_impl.5} parent=5 // pred_region
        %s1355 = ssub.s32 %s12, 2
        // Predicated region
        $region177: #{_forward_impl.5} parent=175 // pred_check
          %p1356 = pneg %p81
        $region178: #{_forward_impl.5} parent=175 // pred_check_branch
          %1358 = sbr.rel (%p1356) target = $region180
        $region179: #{_forward_impl.5} parent=175 // pred_region
          %s1359 = sand.u32 %s66, 1
          %s1360 = scalar_lea.sflag [#allocation6], %s1359
          %s1361 = sand.u32 %s66, 1
          %s1362 = smul.addr %s1361, 32
          %s1363 = scalar_lea.vmem [#allocation5], %s1362
          %1364 = dma.done %s1360, 512
        $region180: #{_forward_impl.5} parent=175 // pred_fallthru
          _
      $region176: #{_forward_impl.5} parent=5 // pred_fallthru
        _
    $region6: #{_forward_impl.5} parent=1 // loop_footer
      %s16 = sadd.s32 1, %s12
    $region7: #{_forward_impl.5} parent=1 // loop_footer_branch
      %11 = sbr.rel target = $region3
    $region8: #{_forward_impl.5} parent=1 // loop_exit
      _
    %1365 = vsyncpa [#allocation6], 1
    %s1366 = scalar_lea.sflag [#allocation6], 1
    %1367 = vsyncpa %s1366, 1
  %1368 = vsyncmov [#allocation4]
  %s1369 = vpop.sfrf %1368
  %p1370 = scmp.eq.s32.totalorder %s1369, 0
  %p1371 = pneg %p1370
  %1373 = shalt.err (%p1371)
  %s1374 = scalar_lea.sflag [#allocation4], 1
  %1375 = vsyncmov %s1374
  %s1376 = vpop.sfrf %1375
  %p1377 = scmp.eq.s32.totalorder %s1376, 0
  %p1378 = pneg %p1377
  %1380 = shalt.err (%p1378)
  %s1381 = scalar_lea.sflag [#allocation4], 2
  %1382 = vsyncmov %s1381
  %s1383 = vpop.sfrf %1382
  %p1384 = scmp.eq.s32.totalorder %s1383, 0
  %p1385 = pneg %p1384
  %1387 = shalt.err (%p1385)
  %s1388 = scalar_lea.sflag [#allocation4], 3
  %1389 = vsyncmov %s1388
  %s1390 = vpop.sfrf %1389
  %p1391 = scmp.eq.s32.totalorder %s1390, 0
  %p1392 = pneg %p1391
  %1394 = shalt.err (%p1392)

</llo_original>
